<compile_context>
chip_gen: v7x
topology: tpu7x:2x2x1
jax: 0.10.0
libtpu: 0.0.40
codegen_flags: <defaults>
</compile_context>

<pallas_src>
import functools

import jax
import jax.numpy as jnp
from jax.experimental import pallas as pl
from jax.experimental.pallas import tpu as pltpu


# ----------------------------------------------------------------------------
# Constants (module hyper-parameters)
# ----------------------------------------------------------------------------
FEAT_DIM = 512       # resnet18 output_num()
WIDTH = 1024         # classifier hidden width
NUM_CLASS = 8
CONV_CIN = 3
CONV_COUT = FEAT_DIM
KH = KW = 3
KP = 32              # im2col contraction dim (9*3 = 27) padded to 32 lanes


# ----------------------------------------------------------------------------
# Fused Pallas kernel:
#   conv-as-matmul + bias + ReLU  ->  GAP accumulate  ->  classifier (last step)
# ----------------------------------------------------------------------------
def _fused_kernel(p_ref, wc_ref, bc_ref, w1_ref, b1_ref, w2_ref, b2_ref,
                  o_ref, acc_ref, *, hw_true, tile_hw, nc_pad):
    sp = pl.program_id(1)
    last = pl.num_programs(1) - 1

    @pl.when(sp == 0)
    def _():
        acc_ref[...] = jnp.zeros_like(acc_ref)

    # Conv stem as matmul on this spatial tile (bf16 operands, f32 accumulate).
    mm = jnp.dot(p_ref[...], wc_ref[...], preferred_element_type=jnp.float32)
    r = jnp.maximum(mm + bc_ref[...], 0.0)                    # (tile_hw, 512) f32

    def _accumulate(rv):
        # Reduce only to 8 sublanes per step (pure VALU adds of whole vreg
        # rows; no cross-sublane XLU work until the final collapse).
        acc_ref[...] += jnp.sum(rv.reshape(tile_hw // 8, 8, rv.shape[-1]),
                                axis=0)                       # (8, 512)

    # All tiles except the last are fully valid: no masking needed.
    @pl.when(sp != last)
    def _():
        _accumulate(r)

    # Last spatial tile: mask zero-padded rows, finish GAP, run the head.
    @pl.when(sp == last)
    def _():
        row = sp * tile_hw + jax.lax.broadcasted_iota(
            jnp.int32, (tile_hw, 1), 0)
        _accumulate(jnp.where(row < hw_true, r, 0.0))

        feat = (jnp.sum(acc_ref[...], axis=0, keepdims=True)
                * jnp.float32(1.0 / hw_true))                 # (1, 512) f32
        h = jnp.dot(feat.astype(jnp.bfloat16), w1_ref[...],
                    preferred_element_type=jnp.float32)
        h = jnp.maximum(h + b1_ref[...], 0.0)                 # (1, 1024) f32
        # TODO(synk): nn.Dropout(0.5) is identity here (inference mode).
        logits = jnp.dot(h.astype(jnp.bfloat16), w2_ref[...],
                         preferred_element_type=jnp.float32) + b2_ref[...]
        # Sublane-aligned, lane-dense store: 8 identical rows of 128 lanes.
        o_ref[...] = jnp.broadcast_to(logits, (8, nc_pad))


def _call_fused(patches, w_conv, b_conv, w1, b1, w2, b2, *, hw_true, tile_hw):
    B, hw_pad, kp = patches.shape
    n_sp = hw_pad // tile_hw
    cout = w_conv.shape[1]
    width = w1.shape[1]
    nc_pad = w2.shape[1]

    kernel = functools.partial(_fused_kernel, hw_true=hw_true,
                               tile_hw=tile_hw, nc_pad=nc_pad)

    # Deeper pipelining on the only streamed operand when the spatial loop is
    # long enough to exploit it.
    if n_sp >= 3:
        patches_spec = pl.BlockSpec((None, tile_hw, kp), lambda b, s: (b, s, 0),
                                    pipeline_mode=pl.Buffered(3))
    else:
        patches_spec = pl.BlockSpec((None, tile_hw, kp), lambda b, s: (b, s, 0))

    return pl.pallas_call(
        kernel,
        out_shape=jax.ShapeDtypeStruct((B, 8, nc_pad), jnp.float32),
        grid_spec=pltpu.PrefetchScalarGridSpec(
            num_scalar_prefetch=0,
            grid=(B, n_sp),
            in_specs=[
                # patches: per-batch spatial tiles (pipelined over HBM)
                patches_spec,
                # weights / biases: resident in VMEM (constant block index)
                pl.BlockSpec((kp, cout), lambda b, s: (0, 0)),
                pl.BlockSpec((1, cout), lambda b, s: (0, 0)),
                pl.BlockSpec((cout, width), lambda b, s: (0, 0)),
                pl.BlockSpec((1, width), lambda b, s: (0, 0)),
                pl.BlockSpec((width, nc_pad), lambda b, s: (0, 0)),
                pl.BlockSpec((1, nc_pad), lambda b, s: (0, 0)),
            ],
            out_specs=pl.BlockSpec((None, 8, nc_pad), lambda b, s: (b, 0, 0)),
            scratch_shapes=[pltpu.VMEM((8, cout), jnp.float32)],
        ),
        compiler_params=pltpu.CompilerParams(
            dimension_semantics=("parallel", "arbitrary"),
        ),
    )(patches, w_conv, b_conv, w1, b1, w2, b2)


# ----------------------------------------------------------------------------
# Parameter construction (deterministic, matches module __init__ shapes/init)
# ----------------------------------------------------------------------------
def make_params(key, num_class=NUM_CLASS):
    k_conv, k_w1, k_w2 = jax.random.split(key, 3)
    # Stand-in backbone conv stem: [kh*kw*cin, cout] (im2col layout), bias 0.
    w_conv = 0.05 * jax.random.normal(
        k_conv, (KH * KW * CONV_CIN, CONV_COUT), dtype=jnp.float32)
    b_conv = jnp.zeros((1, CONV_COUT), dtype=jnp.float32)
    # Classifier: weight.data.normal_(0, 0.01), bias = 0 (exactly as __init__).
    w1 = 0.01 * jax.random.normal(k_w1, (FEAT_DIM, WIDTH), dtype=jnp.float32)
    b1 = jnp.zeros((1, WIDTH), dtype=jnp.float32)
    w2 = 0.01 * jax.random.normal(k_w2, (WIDTH, num_class), dtype=jnp.float32)
    b2 = jnp.zeros((1, num_class), dtype=jnp.float32)
    return dict(w_conv=w_conv, b_conv=b_conv, w1=w1, b1=b1, w2=w2, b2=b2)


# ----------------------------------------------------------------------------
# im2col for the 3x3 stride-2 pad-1 stem, emitted directly as a padded bf16
# array (no f32 (B, HW, 27) intermediate, no second padded copy).
# ----------------------------------------------------------------------------
def _im2col_3x3_s2_bf16(x_nhwc, Ho, Wo, hw_pad):
    B, H, W, C = x_nhwc.shape
    K = KH * KW * C
    HW = Ho * Wo
    xp = jnp.pad(x_nhwc.astype(jnp.bfloat16), ((0, 0), (1, 1), (1, 1), (0, 0)))
    cols = []
    for dy in range(KH):
        for dx in range(KW):
            cols.append(xp[:, dy:dy + 2 * Ho - 1:2, dx:dx + 2 * Wo - 1:2, :])
    patches = jnp.concatenate(cols, axis=-1)            # (B, Ho, Wo, 9C) bf16
    patches = patches.reshape(B, HW, K)
    return jnp.pad(patches, ((0, 0), (0, hw_pad - HW), (0, KP - K)))


# ----------------------------------------------------------------------------
# Forward pass
# ----------------------------------------------------------------------------
@jax.jit
def base_net_forward(x_nchw, params):
    """x_nchw: [B, 3, H, W] float32 -> logits [B, num_class]."""
    B, C, H, W = x_nchw.shape
    num_class = params["w2"].shape[1]
    nc_pad = ((num_class + 127) // 128) * 128

    Ho = (H - 1) // 2 + 1
    Wo = (W - 1) // 2 + 1
    HW = Ho * Wo
    K = KH * KW * C

    # Spatial tiling: large tiles (2048 rows) when available to amortize the
    # ~600-cycle per-grid-step overhead; padded-to-8 spatial extent otherwise.
    tile_hw = 2048 if HW >= 2048 else ((HW + 7) // 8) * 8
    hw_pad = pl.cdiv(HW, tile_hw) * tile_hw

    x_nhwc = jnp.transpose(x_nchw, (0, 2, 3, 1))        # NCHW -> NHWC
    patches = _im2col_3x3_s2_bf16(x_nhwc, Ho, Wo, hw_pad)  # (B, hw_pad, 32) bf16

    # bf16 MXU operands (f32 biases / accumulation inside the kernel).
    w_conv = jnp.pad(params["w_conv"], ((0, KP - K), (0, 0))).astype(jnp.bfloat16)
    b_conv = params["b_conv"]
    w1 = params["w1"].astype(jnp.bfloat16)
    b1 = params["b1"]
    w2 = jnp.pad(params["w2"],
                 ((0, 0), (0, nc_pad - num_class))).astype(jnp.bfloat16)
    b2 = jnp.pad(params["b2"], ((0, 0), (0, nc_pad - num_class)))

    logits_pad = _call_fused(patches, w_conv, b_conv, w1, b1, w2, b2,
                             hw_true=HW, tile_hw=tile_hw)   # (B, 8, nc_pad)
    return logits_pad[:, 0, :num_class]


# ----------------------------------------------------------------------------
if __name__ == "__main__":
    key = jax.random.PRNGKey(0)
    k_x, k_p = jax.random.split(key)

    x = jax.random.normal(k_x, (2, 3, 16, 16), dtype=jnp.float32)  # NCHW input
    params = make_params(k_p)

    out = base_net_forward(x, params)
    out = jax.block_until_ready(out)

    assert out.shape == (2, NUM_CLASS), out.shape
    assert bool(jnp.all(jnp.isfinite(out)))
    print("KERNEL_OK")
</pallas_src>

<mosaic_0001>
module attributes {stable_mosaic.version = 11 : i64} {
  func.func @_fused_kernel(%arg0: i32, %arg1: i32, %arg2: memref<1x64x32xbf16, #tpu.memory_space<vmem>>, %arg3: memref<32x512xbf16, #tpu.memory_space<vmem>>, %arg4: memref<1x512xf32, #tpu.memory_space<vmem>>, %arg5: memref<512x1024xbf16, #tpu.memory_space<vmem>>, %arg6: memref<1x1024xf32, #tpu.memory_space<vmem>>, %arg7: memref<1024x128xbf16, #tpu.memory_space<vmem>>, %arg8: memref<1x128xf32, #tpu.memory_space<vmem>>, %arg9: memref<1x8x128xf32, #tpu.memory_space<vmem>>, %arg10: memref<8x512xf32, #tpu.memory_space<vmem>>) attributes {dimension_semantics = [#tpu.dimension_semantics<parallel>, #tpu.dimension_semantics<arbitrary>], iteration_bounds = array<i64: 2, 1>, scalar_prefetch = 0 : i64, scratch_operands = 1 : i64, tpu.core_type = #tpu.core_type<tc>, window_params = [{transform_indices = @transform_0, window_bounds = array<i64: 1, 64, 32>}, {pipeline_mode = #tpu.pipeline_mode<synchronous>, transform_indices = @transform_1, window_bounds = array<i64: 32, 512>}, {pipeline_mode = #tpu.pipeline_mode<synchronous>, transform_indices = @transform_2, window_bounds = array<i64: 1, 512>}, {pipeline_mode = #tpu.pipeline_mode<synchronous>, transform_indices = @transform_3, window_bounds = array<i64: 512, 1024>}, {pipeline_mode = #tpu.pipeline_mode<synchronous>, transform_indices = @transform_4, window_bounds = array<i64: 1, 1024>}, {pipeline_mode = #tpu.pipeline_mode<synchronous>, transform_indices = @transform_5, window_bounds = array<i64: 1024, 128>}, {pipeline_mode = #tpu.pipeline_mode<synchronous>, transform_indices = @transform_6, window_bounds = array<i64: 1, 128>}, {transform_indices = @transform_7, window_bounds = array<i64: 1, 8, 128>}]} {
    %c0_i32 = arith.constant 0 : i32
    %0 = arith.cmpi eq, %arg1, %c0_i32 : i32
    %1 = arith.extui %0 : i1 to i32
    %c0_i32_0 = arith.constant 0 : i32
    %2 = arith.cmpi ne, %1, %c0_i32_0 : i32
    scf.if %2 {
      %cst_12 = arith.constant 0.000000e+00 : f32
      %18 = vector.broadcast %cst_12 : f32 to vector<8x512xf32>
      %c0_13 = arith.constant 0 : index
      %c0_14 = arith.constant 0 : index
      %19 = vector.load %arg10[%c0_13, %c0_14] : memref<8x512xf32, #tpu.memory_space<vmem>>, vector<8x512xf32>
      tpu.vector_store %arg10[%c0_13, %c0_14], %18 {strides = array<i32>} : memref<8x512xf32, #tpu.memory_space<vmem>>, vector<8x512xf32>,
    } else {
    }
    %c0 = arith.constant 0 : index
    %c0_1 = arith.constant 0 : index
    %c0_2 = arith.constant 0 : index
    %3 = vector.load %arg2[%c0, %c0_1, %c0_2] : memref<1x64x32xbf16, #tpu.memory_space<vmem>>, vector<1x64x32xbf16>
    %4 = vector.shape_cast %3 : vector<1x64x32xbf16> to vector<64x32xbf16>
    %c0_3 = arith.constant 0 : index
    %c0_4 = arith.constant 0 : index
    %5 = vector.load %arg3[%c0_3, %c0_4] : memref<32x512xbf16, #tpu.memory_space<vmem>>, vector<32x512xbf16>
    %cst = arith.constant dense<0.000000e+00> : vector<64x512xf32>
    %6 = tpu.matmul %4, %5, %cst {dimension_numbers = #tpu.dot_dimension_numbers<[1], [0], [0], [1], [0, 0, 1, 1], [], []>} : vector<64x32xbf16>, vector<32x512xbf16>, vector<64x512xf32> -> vector<64x512xf32>
    %c0_5 = arith.constant 0 : index
    %c0_6 = arith.constant 0 : index
    %7 = vector.load %arg4[%c0_5, %c0_6] : memref<1x512xf32, #tpu.memory_space<vmem>>, vector<1x512xf32>
    %8 = vector.broadcast %7 : vector<1x512xf32> to vector<64x512xf32>
    %9 = arith.addf %6, %8 : vector<64x512xf32>
    %cst_7 = arith.constant 0.000000e+00 : f32
    %10 = vector.broadcast %cst_7 : f32 to vector<64x512xf32>
    %11 = arith.maximumf %9, %10 : vector<64x512xf32>
    %c0_i32_8 = arith.constant 0 : i32
    %12 = arith.cmpi ne, %arg1, %c0_i32_8 : i32
    %13 = arith.extui %12 : i1 to i32
    %c0_i32_9 = arith.constant 0 : i32
    %14 = arith.cmpi ne, %13, %c0_i32_9 : i32
    scf.if %14 {
      %c0_12 = arith.constant 0 : index
      %c0_13 = arith.constant 0 : index
      %18 = vector.load %arg10[%c0_12, %c0_13] : memref<8x512xf32, #tpu.memory_space<vmem>>, vector<8x512xf32>
      %19 = vector.shape_cast %11 : vector<64x512xf32> to vector<8x8x512xf32>
      %cst_14 = arith.constant dense<0.000000e+00> : vector<8x512xf32>
      %20 = vector.multi_reduction <add>, %19, %cst_14 [0] : vector<8x8x512xf32> to vector<8x512xf32>
      %21 = arith.addf %18, %20 : vector<8x512xf32>
      %c0_15 = arith.constant 0 : index
      %c0_16 = arith.constant 0 : index
      %22 = vector.load %arg10[%c0_15, %c0_16] : memref<8x512xf32, #tpu.memory_space<vmem>>, vector<8x512xf32>
      tpu.vector_store %arg10[%c0_15, %c0_16], %21 {strides = array<i32>} : memref<8x512xf32, #tpu.memory_space<vmem>>, vector<8x512xf32>,
    } else {
    }
    %c0_i32_10 = arith.constant 0 : i32
    %15 = arith.cmpi eq, %arg1, %c0_i32_10 : i32
    %16 = arith.extui %15 : i1 to i32
    %c0_i32_11 = arith.constant 0 : i32
    %17 = arith.cmpi ne, %16, %c0_i32_11 : i32
    scf.if %17 {
      %c64_i32 = arith.constant 64 : i32
      %18 = arith.muli %arg1, %c64_i32 : i32
      %19 = tpu.iota {dimensions = array<i32: 0>} : vector<64x1xi32>
      %20 = vector.broadcast %18 : i32 to vector<64x1xi32>
      %21 = arith.addi %20, %19 : vector<64x1xi32>
      %c64_i32_12 = arith.constant 64 : i32
      %22 = vector.broadcast %c64_i32_12 : i32 to vector<64x1xi32>
      %23 = arith.cmpi slt, %21, %22 : vector<64x1xi32>
      %cst_13 = arith.constant 0.000000e+00 : f32
      %24 = vector.shape_cast %23 : vector<64x1xi1> to vector<64x1xi1>
      %25 = vector.broadcast %24 : vector<64x1xi1> to vector<64x512xi1>
      %26 = vector.broadcast %cst_13 : f32 to vector<64x512xf32>
      %27 = arith.select %25, %11, %26 : vector<64x512xi1>, vector<64x512xf32>
      %c0_14 = arith.constant 0 : index
      %c0_15 = arith.constant 0 : index
      %28 = vector.load %arg10[%c0_14, %c0_15] : memref<8x512xf32, #tpu.memory_space<vmem>>, vector<8x512xf32>
      %29 = vector.shape_cast %27 : vector<64x512xf32> to vector<8x8x512xf32>
      %cst_16 = arith.constant dense<0.000000e+00> : vector<8x512xf32>
      %30 = vector.multi_reduction <add>, %29, %cst_16 [0] : vector<8x8x512xf32> to vector<8x512xf32>
      %31 = arith.addf %28, %30 : vector<8x512xf32>
      %c0_17 = arith.constant 0 : index
      %c0_18 = arith.constant 0 : index
      %32 = vector.load %arg10[%c0_17, %c0_18] : memref<8x512xf32, #tpu.memory_space<vmem>>, vector<8x512xf32>
      tpu.vector_store %arg10[%c0_17, %c0_18], %31 {strides = array<i32>} : memref<8x512xf32, #tpu.memory_space<vmem>>, vector<8x512xf32>,
      %c0_19 = arith.constant 0 : index
      %c0_20 = arith.constant 0 : index
      %33 = vector.load %arg10[%c0_19, %c0_20] : memref<8x512xf32, #tpu.memory_space<vmem>>, vector<8x512xf32>
      %cst_21 = arith.constant dense<0.000000e+00> : vector<512xf32>
      %34 = vector.multi_reduction <add>, %33, %cst_21 [0] : vector<8x512xf32> to vector<512xf32>
      %35 = vector.shape_cast %34 : vector<512xf32> to vector<1x512xf32>
      %cst_22 = arith.constant 1.562500e-02 : f32
      %36 = vector.broadcast %cst_22 : f32 to vector<1x512xf32>
      %37 = arith.mulf %35, %36 : vector<1x512xf32>
      %38 = arith.truncf %37 : vector<1x512xf32> to vector<1x512xbf16>
      %c0_23 = arith.constant 0 : index
      %c0_24 = arith.constant 0 : index
      %39 = vector.load %arg5[%c0_23, %c0_24] : memref<512x1024xbf16, #tpu.memory_space<vmem>>, vector<512x1024xbf16>
      %cst_25 = arith.constant dense<0.000000e+00> : vector<1x1024xf32>
      %40 = tpu.matmul %38, %39, %cst_25 {dimension_numbers = #tpu.dot_dimension_numbers<[1], [0], [0], [1], [0, 0, 1, 1], [], []>} : vector<1x512xbf16>, vector<512x1024xbf16>, vector<1x1024xf32> -> vector<1x1024xf32>
      %c0_26 = arith.constant 0 : index
      %c0_27 = arith.constant 0 : index
      %41 = vector.load %arg6[%c0_26, %c0_27] : memref<1x1024xf32, #tpu.memory_space<vmem>>, vector<1x1024xf32>
      %42 = arith.addf %40, %41 : vector<1x1024xf32>
      %cst_28 = arith.constant 0.000000e+00 : f32
      %43 = vector.broadcast %cst_28 : f32 to vector<1x1024xf32>
      %44 = arith.maximumf %42, %43 : vector<1x1024xf32>
      %45 = arith.truncf %44 : vector<1x1024xf32> to vector<1x1024xbf16>
      %c0_29 = arith.constant 0 : index
      %c0_30 = arith.constant 0 : index
      %46 = vector.load %arg7[%c0_29, %c0_30] : memref<1024x128xbf16, #tpu.memory_space<vmem>>, vector<1024x128xbf16>
      %cst_31 = arith.constant dense<0.000000e+00> : vector<1x128xf32>
      %47 = tpu.matmul %45, %46, %cst_31 {dimension_numbers = #tpu.dot_dimension_numbers<[1], [0], [0], [1], [0, 0, 1, 1], [], []>} : vector<1x1024xbf16>, vector<1024x128xbf16>, vector<1x128xf32> -> vector<1x128xf32>
      %c0_32 = arith.constant 0 : index
      %c0_33 = arith.constant 0 : index
      %48 = vector.load %arg8[%c0_32, %c0_33] : memref<1x128xf32, #tpu.memory_space<vmem>>, vector<1x128xf32>
      %49 = arith.addf %47, %48 : vector<1x128xf32>
      %50 = vector.shape_cast %49 : vector<1x128xf32> to vector<1x128xf32>
      %51 = vector.broadcast %50 : vector<1x128xf32> to vector<8x128xf32>
      %c0_34 = arith.constant 0 : index
      %c0_35 = arith.constant 0 : index
      %c0_36 = arith.constant 0 : index
      %52 = vector.load %arg9[%c0_34, %c0_35, %c0_36] : memref<1x8x128xf32, #tpu.memory_space<vmem>>, vector<1x8x128xf32>
      %53 = vector.shape_cast %52 : vector<1x8x128xf32> to vector<8x128xf32>
      %54 = vector.shape_cast %51 : vector<8x128xf32> to vector<1x8x128xf32>
      tpu.vector_store %arg9[%c0_34, %c0_35, %c0_36], %54 {strides = array<i32>} : memref<1x8x128xf32, #tpu.memory_space<vmem>>, vector<1x8x128xf32>,
    } else {
    }
    return
  }
  func.func @transform_0(%arg0: i32, %arg1: i32) -> (i32, i32, i32) {
    %c0_i32 = arith.constant 0 : i32
    %c0_i32_0 = arith.constant 0 : i32
    return %arg0, %arg1, %c0_i32 : i32, i32, i32
  }
  func.func @transform_1(%arg0: i32, %arg1: i32) -> (i32, i32) {
    %c0_i32 = arith.constant 0 : i32
    %c0_i32_0 = arith.constant 0 : i32
    %c0_i32_1 = arith.constant 0 : i32
    return %c0_i32, %c0_i32_0 : i32, i32
  }
  func.func @transform_2(%arg0: i32, %arg1: i32) -> (i32, i32) {
    %c0_i32 = arith.constant 0 : i32
    %c0_i32_0 = arith.constant 0 : i32
    %c0_i32_1 = arith.constant 0 : i32
    return %c0_i32, %c0_i32_0 : i32, i32
  }
  func.func @transform_3(%arg0: i32, %arg1: i32) -> (i32, i32) {
    %c0_i32 = arith.constant 0 : i32
    %c0_i32_0 = arith.constant 0 : i32
    %c0_i32_1 = arith.constant 0 : i32
    return %c0_i32, %c0_i32_0 : i32, i32
  }
  func.func @transform_4(%arg0: i32, %arg1: i32) -> (i32, i32) {
    %c0_i32 = arith.constant 0 : i32
    %c0_i32_0 = arith.constant 0 : i32
    %c0_i32_1 = arith.constant 0 : i32
    return %c0_i32, %c0_i32_0 : i32, i32
  }
  func.func @transform_5(%arg0: i32, %arg1: i32) -> (i32, i32) {
    %c0_i32 = arith.constant 0 : i32
    %c0_i32_0 = arith.constant 0 : i32
    %c0_i32_1 = arith.constant 0 : i32
    return %c0_i32, %c0_i32_0 : i32, i32
  }
  func.func @transform_6(%arg0: i32, %arg1: i32) -> (i32, i32) {
    %c0_i32 = arith.constant 0 : i32
    %c0_i32_0 = arith.constant 0 : i32
    %c0_i32_1 = arith.constant 0 : i32
    return %c0_i32, %c0_i32_0 : i32, i32
  }
  func.func @transform_7(%arg0: i32, %arg1: i32) -> (i32, i32, i32) {
    %c0_i32 = arith.constant 0 : i32
    %c0_i32_0 = arith.constant 0 : i32
    %c0_i32_1 = arith.constant 0 : i32
    return %arg0, %c0_i32, %c0_i32_0 : i32, i32, i32
  }
}

</mosaic_0001>

<llo_original>
// kernel: base_net_forward.1
$region0: #{base_net_forward.1}
  #allocation0 [shape = 'u32[]', space=smem, size = 0x4, offset = 0x4, fixed_abs, tag = 'smem constant byte address 0x4 - core index']
  #allocation1 [shape = 'u32[144,128]{1,0:T(1,128)}', space=vmem, size = 0x12000, scoped, tag = 'internal scratch']
  #allocation2 [shape = 'f32[8,512]{1,0:T(8,128)}', space=vmem, size = 0x4000, scoped, tag = 'scratch operand']
  %s0 = inlined_call_operand.vmem [shape: bf16[2,64,32], index: 0, kind: input, shape index: {}]
  %s1 = inlined_call_operand.vmem [shape: bf16[32,512], index: 1, kind: input, shape index: {}]
  %s2 = inlined_call_operand.vmem [shape: f32[1,512], index: 2, kind: input, shape index: {}]
  %s3 = inlined_call_operand.vmem [shape: bf16[512,1024], index: 3, kind: input, shape index: {}]
  %s4 = inlined_call_operand.vmem [shape: f32[1,1024], index: 4, kind: input, shape index: {}]
  %s5 = inlined_call_operand.vmem [shape: bf16[1024,128], index: 5, kind: input, shape index: {}]
  %s6 = inlined_call_operand.vmem [shape: f32[1,128], index: 6, kind: input, shape index: {}]
  %s7 = inlined_call_operand.vmem [shape: f32[2,8,128], index: 7, kind: output, shape index: {}]
  %s8 = sld [smem:[#allocation0]]
  $region73: #{base_net_forward.1} parent=0
    _
  %s10 = ssub.s32 1, %s8
  %s11 = scalar_select 0, %s10, %s8
  loop: start=0, step=1, limit=4
  $region2: #{base_net_forward.1} parent=0 // loop_pre_header
    _
  $region3: #{base_net_forward.1} parent=0 // loop_header
    %s13 = sphi 0, %s17
    %p14 = scmp.ge.s32.totalorder %s13, 4
    %s20 = sphi 0, %s32
    %s21 = sphi 0, %s28
    %s22 = sphi 0, %s20
    %s23 = sphi 0, %s21
    %s24 = sphi 0, %s22
    %s25 = sphi 0, %s23
    %s37 = sphi 0, %s39
    %s40 = sphi 0, %s37
    %s41 = sphi 0, %s40
    %s57 = sphi 0, %s41
    %s61 = sphi 0, %s61
    %s63 = sphi 0, %s61
    %s64 = sphi 0, %s63
    %s78 = sphi 0, %s64
    %s82 = sphi 0, %s82
    %s84 = sphi 0, %s82
    %s85 = sphi 0, %s84
    %s99 = sphi 0, %s85
    %s103 = sphi 0, %s103
    %s105 = sphi 0, %s103
    %s106 = sphi 0, %s105
    %s120 = sphi 0, %s106
    %s124 = sphi 0, %s124
    %s126 = sphi 0, %s124
    %s127 = sphi 0, %s126
    %s141 = sphi 0, %s127
    %s145 = sphi 0, %s145
    %s147 = sphi 0, %s145
    %s148 = sphi 0, %s147
    %s162 = sphi 0, %s148
    %s166 = sphi 0, %s166
    %s168 = sphi 0, %s166
    %s169 = sphi 0, %s168
    %s183 = sphi 0, %s169
    %s189 = sphi 0, %s191
    %s192 = sphi 0, %s189
    %s193 = sphi 0, %s192
    %s209 = sphi 0, %s193
  $region4: #{base_net_forward.1} parent=0 // loop_header_branch
    %16 = sbr.rel (%p14) target = $region8
  $region5: #{base_net_forward.1} parent=0 // loop_body
    %s18 = ssub.s32 %s13, 1
    %s19 = ssub.s32 %s13, 2
    %s26 = sadd.s32 1, %s21
    %p27 = scmp.ge.s32.totalorder %s26, 1
    %s28 = scalar_select %p27, 0, %s26
    %s29 = sadd.s32 1, %s20
    %s30 = scalar_select %p27, %s29, %s20
    %p31 = scmp.ge.s32.totalorder %s30, 2
    %s32 = scalar_select %p31, 0, %s30
    %s33 = ssub.s32 %s20, %s32
    %s34 = ssub.s32 %s21, %s28
    %s35 = sor.u32 %s33, %s34
    %p36 = scmp.eq.s32.totalorder %s35, 0
    %s38 = sadd.s32 %s37, 1
    %s39 = scalar_select %p36, %s37, %s38
    %p42 = pneg %p36
    %p43 = scmp.eq.s32.totalorder %s13, 1
    %p44 = por %p42, %p43
    %p45 = scmp.ne.s32.totalorder %s37, %s40
    %p46 = scmp.eq.s32.totalorder %s13, 0
    %p47 = por %p45, %p46
    %p48 = scmp.ne.s32.totalorder %s37, %s40
    %p49 = scmp.eq.s32.totalorder %s18, 1
    %p50 = por %p48, %p49
    %p51 = scmp.ne.s32.totalorder %s40, %s41
    %p52 = scmp.eq.s32.totalorder %s18, 0
    %p53 = por %p51, %p52
    %p54 = scmp.ne.s32.totalorder %s40, %s41
    %p55 = scmp.eq.s32.totalorder %s19, 1
    %p56 = por %p54, %p55
    %p58 = scmp.ne.s32.totalorder %s41, %s57
    %p59 = scmp.eq.s32.totalorder %s19, 0
    %p60 = por %p58, %p59
    %s62 = sadd.s32 %s61, 1
    %p65 = scmp.eq.s32.totalorder %s13, 1
    %p66 = scmp.ne.s32.totalorder %s61, %s63
    %p67 = scmp.eq.s32.totalorder %s13, 0
    %p68 = por %p66, %p67
    %p69 = scmp.ne.s32.totalorder %s61, %s63
    %p70 = scmp.eq.s32.totalorder %s18, 1
    %p71 = por %p69, %p70
    %p72 = scmp.ne.s32.totalorder %s63, %s64
    %p73 = scmp.eq.s32.totalorder %s18, 0
    %p74 = por %p72, %p73
    %p75 = scmp.ne.s32.totalorder %s63, %s64
    %p76 = scmp.eq.s32.totalorder %s19, 1
    %p77 = por %p75, %p76
    %p79 = scmp.ne.s32.totalorder %s64, %s78
    %p80 = scmp.eq.s32.totalorder %s19, 0
    %p81 = por %p79, %p80
    %s83 = sadd.s32 %s82, 1
    %p86 = scmp.eq.s32.totalorder %s13, 1
    %p87 = scmp.ne.s32.totalorder %s82, %s84
    %p88 = scmp.eq.s32.totalorder %s13, 0
    %p89 = por %p87, %p88
    %p90 = scmp.ne.s32.totalorder %s82, %s84
    %p91 = scmp.eq.s32.totalorder %s18, 1
    %p92 = por %p90, %p91
    %p93 = scmp.ne.s32.totalorder %s84, %s85
    %p94 = scmp.eq.s32.totalorder %s18, 0
    %p95 = por %p93, %p94
    %p96 = scmp.ne.s32.totalorder %s84, %s85
    %p97 = scmp.eq.s32.totalorder %s19, 1
    %p98 = por %p96, %p97
    %p100 = scmp.ne.s32.totalorder %s85, %s99
    %p101 = scmp.eq.s32.totalorder %s19, 0
    %p102 = por %p100, %p101
    %s104 = sadd.s32 %s103, 1
    %p107 = scmp.eq.s32.totalorder %s13, 1
    %p108 = scmp.ne.s32.totalorder %s103, %s105
    %p109 = scmp.eq.s32.totalorder %s13, 0
    %p110 = por %p108, %p109
    %p111 = scmp.ne.s32.totalorder %s103, %s105
    %p112 = scmp.eq.s32.totalorder %s18, 1
    %p113 = por %p111, %p112
    %p114 = scmp.ne.s32.totalorder %s105, %s106
    %p115 = scmp.eq.s32.totalorder %s18, 0
    %p116 = por %p114, %p115
    %p117 = scmp.ne.s32.totalorder %s105, %s106
    %p118 = scmp.eq.s32.totalorder %s19, 1
    %p119 = por %p117, %p118
    %p121 = scmp.ne.s32.totalorder %s106, %s120
    %p122 = scmp.eq.s32.totalorder %s19, 0
    %p123 = por %p121, %p122
    %s125 = sadd.s32 %s124, 1
    %p128 = scmp.eq.s32.totalorder %s13, 1
    %p129 = scmp.ne.s32.totalorder %s124, %s126
    %p130 = scmp.eq.s32.totalorder %s13, 0
    %p131 = por %p129, %p130
    %p132 = scmp.ne.s32.totalorder %s124, %s126
    %p133 = scmp.eq.s32.totalorder %s18, 1
    %p134 = por %p132, %p133
    %p135 = scmp.ne.s32.totalorder %s126, %s127
    %p136 = scmp.eq.s32.totalorder %s18, 0
    %p137 = por %p135, %p136
    %p138 = scmp.ne.s32.totalorder %s126, %s127
    %p139 = scmp.eq.s32.totalorder %s19, 1
    %p140 = por %p138, %p139
    %p142 = scmp.ne.s32.totalorder %s127, %s141
    %p143 = scmp.eq.s32.totalorder %s19, 0
    %p144 = por %p142, %p143
    %s146 = sadd.s32 %s145, 1
    %p149 = scmp.eq.s32.totalorder %s13, 1
    %p150 = scmp.ne.s32.totalorder %s145, %s147
    %p151 = scmp.eq.s32.totalorder %s13, 0
    %p152 = por %p150, %p151
    %p153 = scmp.ne.s32.totalorder %s145, %s147
    %p154 = scmp.eq.s32.totalorder %s18, 1
    %p155 = por %p153, %p154
    %p156 = scmp.ne.s32.totalorder %s147, %s148
    %p157 = scmp.eq.s32.totalorder %s18, 0
    %p158 = por %p156, %p157
    %p159 = scmp.ne.s32.totalorder %s147, %s148
    %p160 = scmp.eq.s32.totalorder %s19, 1
    %p161 = por %p159, %p160
    %p163 = scmp.ne.s32.totalorder %s148, %s162
    %p164 = scmp.eq.s32.totalorder %s19, 0
    %p165 = por %p163, %p164
    %s167 = sadd.s32 %s166, 1
    %p170 = scmp.eq.s32.totalorder %s13, 1
    %p171 = scmp.ne.s32.totalorder %s166, %s168
    %p172 = scmp.eq.s32.totalorder %s13, 0
    %p173 = por %p171, %p172
    %p174 = scmp.ne.s32.totalorder %s166, %s168
    %p175 = scmp.eq.s32.totalorder %s18, 1
    %p176 = por %p174, %p175
    %p177 = scmp.ne.s32.totalorder %s168, %s169
    %p178 = scmp.eq.s32.totalorder %s18, 0
    %p179 = por %p177, %p178
    %p180 = scmp.ne.s32.totalorder %s168, %s169
    %p181 = scmp.eq.s32.totalorder %s19, 1
    %p182 = por %p180, %p181
    %p184 = scmp.ne.s32.totalorder %s169, %s183
    %p185 = scmp.eq.s32.totalorder %s19, 0
    %p186 = por %p184, %p185
    %s187 = ssub.s32 %s20, %s32
    %p188 = scmp.eq.s32.totalorder %s187, 0
    %s190 = sadd.s32 %s189, 1
    %s191 = scalar_select %p188, %s189, %s190
    %p194 = pneg %p188
    %p195 = scmp.eq.s32.totalorder %s13, 1
    %p196 = por %p194, %p195
    %p197 = scmp.ne.s32.totalorder %s189, %s192
    %p198 = scmp.eq.s32.totalorder %s13, 0
    %p199 = por %p197, %p198
    %p200 = scmp.ne.s32.totalorder %s189, %s192
    %p201 = scmp.eq.s32.totalorder %s18, 1
    %p202 = por %p200, %p201
    %p203 = scmp.ne.s32.totalorder %s192, %s193
    %p204 = scmp.eq.s32.totalorder %s18, 0
    %p205 = por %p203, %p204
    %p206 = scmp.ne.s32.totalorder %s192, %s193
    %p207 = scmp.eq.s32.totalorder %s19, 1
    %p208 = por %p206, %p207
    %p210 = scmp.ne.s32.totalorder %s193, %s209
    %p211 = scmp.eq.s32.totalorder %s19, 0
    %p212 = por %p210, %p211
    %p213 = scmp.le.s32.totalorder 1, %s13
    %p214 = scmp.lt.s32.totalorder %s13, 3
    %p215 = pnand %p213, %p214
    %p216 = pneg %p215
    // Predicated region
    $region9: #{base_net_forward.1} parent=5 // pred_check
      _
    $region10: #{base_net_forward.1} parent=5 // pred_check_branch
      %218 = sbr.rel (%p215) target = $region12
    $region11: #{base_net_forward.1} parent=5 // pred_region
      %s219 = ssub.s32 %s13, 1
      // Predicated region
      $region13: #{base_net_forward.1} parent=11 // pred_check
        %p220 = pneg %p74
      $region14: #{base_net_forward.1} parent=11 // pred_check_branch
        %222 = sbr.rel (%p220) target = $region16
      $region15: #{base_net_forward.1} parent=11 // pred_region
        _
      $region16: #{base_net_forward.1} parent=11 // pred_fallthru
        _
      // Predicated region
      $region17: #{base_net_forward.1} parent=11 // pred_check
        %p223 = pneg %p95
      $region18: #{base_net_forward.1} parent=11 // pred_check_branch
        %225 = sbr.rel (%p223) target = $region20
      $region19: #{base_net_forward.1} parent=11 // pred_region
        _
      $region20: #{base_net_forward.1} parent=11 // pred_fallthru
        _
      // Predicated region
      $region21: #{base_net_forward.1} parent=11 // pred_check
        %p226 = pneg %p116
      $region22: #{base_net_forward.1} parent=11 // pred_check_branch
        %228 = sbr.rel (%p226) target = $region24
      $region23: #{base_net_forward.1} parent=11 // pred_region
        _
      $region24: #{base_net_forward.1} parent=11 // pred_fallthru
        _
      // Predicated region
      $region25: #{base_net_forward.1} parent=11 // pred_check
        %p229 = pneg %p137
      $region26: #{base_net_forward.1} parent=11 // pred_check_branch
        %231 = sbr.rel (%p229) target = $region28
      $region27: #{base_net_forward.1} parent=11 // pred_region
        _
      $region28: #{base_net_forward.1} parent=11 // pred_fallthru
        _
      // Predicated region
      $region29: #{base_net_forward.1} parent=11 // pred_check
        %p232 = pneg %p158
      $region30: #{base_net_forward.1} parent=11 // pred_check_branch
        %234 = sbr.rel (%p232) target = $region32
      $region31: #{base_net_forward.1} parent=11 // pred_region
        _
      $region32: #{base_net_forward.1} parent=11 // pred_fallthru
        _
      // Predicated region
      $region33: #{base_net_forward.1} parent=11 // pred_check
        %p235 = pneg %p179
      $region34: #{base_net_forward.1} parent=11 // pred_check_branch
        %237 = sbr.rel (%p235) target = $region36
      $region35: #{base_net_forward.1} parent=11 // pred_region
        _
      $region36: #{base_net_forward.1} parent=11 // pred_fallthru
        _
    $region12: #{base_net_forward.1} parent=5 // pred_fallthru
      _
    %p238 = scmp.lt.s32.totalorder %s13, 2
    // Predicated region
    $region37: #{base_net_forward.1} parent=5 // pred_check
      %p239 = pneg %p238
    $region38: #{base_net_forward.1} parent=5 // pred_check_branch
      %241 = sbr.rel (%p239) target = $region40
    $region39: #{base_net_forward.1} parent=5 // pred_region
      // Predicated region
      $region41: #{base_net_forward.1} parent=39 // pred_check
        %p242 = pneg %p47
      $region42: #{base_net_forward.1} parent=39 // pred_check_branch
        %244 = sbr.rel (%p242) target = $region44
      $region43: #{base_net_forward.1} parent=39 // pred_region
        %s245 = smul.u32 8, %s21
        %p246 = scmp.lt.s32.totalorder %s20, 1
        %s247 = scalar_select %p246, %s20, 1
        %p248 = scmp.lt.s32.totalorder %s245, 7
        %s249 = scalar_select %p248, %s245, 7
        %s250 = smul.addr %s247, 8
        %s251 = sadd.s32 %s249, %s250
        %s252 = smul.addr %s251, 4
        %s253 = scalar_lea.vmem %s0, %s252
        %s254 = smul.u32 8, %s21
      $region44: #{base_net_forward.1} parent=39 // pred_fallthru
        _
    $region40: #{base_net_forward.1} parent=5 // pred_fallthru
      _
    %p255 = scmp.le.s32.totalorder 1, %s13
    %p256 = scmp.lt.s32.totalorder %s13, 3
    %p257 = pnand %p255, %p256
    %p258 = pneg %p257
    // Predicated region
    $region45: #{base_net_forward.1} parent=5 // pred_check
      _
    $region46: #{base_net_forward.1} parent=5 // pred_check_branch
      %260 = sbr.rel (%p257) target = $region48
    $region47: #{base_net_forward.1} parent=5 // pred_region
      %s261 = ssub.s32 %s13, 1
      %s262 = smul.u32 8, %s23
      %p263 = scmp.lt.s32.totalorder %s22, 1
      %s264 = scalar_select %p263, %s22, 1
      %p265 = scmp.lt.s32.totalorder %s262, 7
      %s266 = scalar_select %p265, %s262, 7
      %s267 = smul.addr %s264, 8
      %s268 = sadd.s32 %s266, %s267
      %s269 = smul.addr %s268, 4
      %s270 = scalar_lea.vmem %s0, %s269
      %p271 = pneg %p53
      %p272 = pneg %p50
      %p273 = pneg %p74
      %p274 = pneg %p71
      %p275 = pneg %p95
      %p276 = pneg %p92
      %p277 = pneg %p116
      %p278 = pneg %p113
      %p279 = pneg %p137
      %p280 = pneg %p134
      %p281 = pneg %p158
      %p282 = pneg %p155
      %p283 = pneg %p179
      %p284 = pneg %p176
      %p285 = pneg %p205
      %p286 = pneg %p202
      %p287 = scmp.lt.s32.totalorder %s22, 1
      %s288 = scalar_select %p287, %s22, 1
      %s289 = smul.addr %s288, 8
      %s290 = scalar_lea.vmem %s7, %s289
      %s291 = smul.u32 8, %s23
      %p292 = scmp.lt.s32.totalorder %s22, 1
      %s293 = scalar_select %p292, %s22, 1
      %p294 = scmp.lt.s32.totalorder %s291, 7
      %s295 = scalar_select %p294, %s291, 7
      %s296 = smul.addr %s293, 8
      %s297 = sadd.s32 %s295, %s296
      %s298 = smul.addr %s297, 4
      %s299 = scalar_lea.vmem %s0, %s298
      %s300 = smul.u32 8, %s23
      %p301 = scmp.lt.s32.totalorder %s22, 1
      %s302 = scalar_select %p301, %s22, 1
      %s303 = smul.addr %s302, 8
      %s304 = scalar_lea.vmem %s7, %s303
      %p306 = scmp.eq.s32.totalorder %s23, 0
      // Predicated region
      $region49: #{base_net_forward.1} parent=47 // pred_check
        %p307 = pneg %p306
      $region50: #{base_net_forward.1} parent=47 // pred_check_branch
        %309 = sbr.rel (%p307) target = $region52
      $region51: #{base_net_forward.1} parent=47 // pred_region
        %310 = vst [vmem:[#allocation2] sm:$0xff] 0.0
        %311 = vst [vmem:[#allocation2 + $0x8] sm:$0xff] 0.0
        %312 = vst [vmem:[#allocation2 + $0x10] sm:$0xff] 0.0
        %313 = vst [vmem:[#allocation2 + $0x18] sm:$0xff] 0.0
      $region52: #{base_net_forward.1} parent=47 // pred_fallthru
        _
      %v314 = vld [vmem:[%s299] sm:$0xf]
      %v315 = vld [vmem:[%s299 + $0x4] sm:$0xf]
      %v316 = vld [vmem:[%s299 + $0x8] sm:$0xf]
      %v317 = vld [vmem:[%s299 + $0xc] sm:$0xf]
      %v318 = vld [vmem:[%s299 + $0x10] sm:$0xf]
      %v319 = vld [vmem:[%s299 + $0x14] sm:$0xf]
      %v320 = vld [vmem:[%s299 + $0x18] sm:$0xf]
      %v321 = vld [vmem:[%s299 + $0x1c] sm:$0xf]
      %v322 = vld [vmem:[%s1] sm:$0xff]
      %v323 = vld [vmem:[%s1 + $0x8] sm:$0xff]
      %v324 = vld [vmem:[%s1 + $0x10] sm:$0xff]
      %v325 = vld [vmem:[%s1 + $0x18] sm:$0xff]
      %v326 = vld [vmem:[%s1 + $0x20] sm:$0xff]
      %v327 = vld [vmem:[%s1 + $0x28] sm:$0xff]
      %v328 = vld [vmem:[%s1 + $0x30] sm:$0xff]
      %v329 = vld [vmem:[%s1 + $0x38] sm:$0xff]
      %v330 = vld [vmem:[%s2] sm:$0xf]
      %v332 = vlaneseq
      %v333 = vshrl.u32 %v332, 7
      %v334 = vsub.s32 0, %v333
      %v335 = vrot.slane %v330, %v334
      %v336 = vlaneseq
      %v337 = vshrl.u32 %v336, 7
      %v338 = vsub.s32 1, %v337
      %v339 = vrot.slane %v330, %v338
      %v340 = vlaneseq
      %v341 = vshrl.u32 %v340, 7
      %v342 = vsub.s32 2, %v341
      %v343 = vrot.slane %v330, %v342
      %v344 = vlaneseq
      %v345 = vshrl.u32 %v344, 7
      %v346 = vsub.s32 3, %v345
      %v347 = vrot.slane %v330, %v346
      %v360 = vunpack.c.l.b16 %v314
      %v361 = vunpack.c.l.b16 %v315
      %v362 = vunpack.c.l.b16 %v316
      %v363 = vunpack.c.l.b16 %v317
      %v364 = vunpack.c.l.b16 %v318
      %v365 = vunpack.c.l.b16 %v319
      %v366 = vunpack.c.l.b16 %v320
      %v367 = vunpack.c.l.b16 %v321
      %v368 = vpack.c.b16 %v361, %v360
      %v369 = vpack.c.b16 %v363, %v362
      %v370 = vpack.c.b16 %v365, %v364
      %v371 = vpack.c.b16 %v367, %v366
      %v380 = vunpack.c.l.b16 %v322
      %v381 = vunpack.c.h.b16 %v322
      %v382 = vunpack.c.l.b16 %v323
      %v383 = vunpack.c.h.b16 %v323
      %v384 = vunpack.c.l.b16 %v324
      %v385 = vunpack.c.h.b16 %v324
      %v386 = vunpack.c.l.b16 %v325
      %v387 = vunpack.c.h.b16 %v325
      %v388 = vunpack.c.l.b16 %v326
      %v389 = vunpack.c.h.b16 %v326
      %v390 = vunpack.c.l.b16 %v327
      %v391 = vunpack.c.h.b16 %v327
      %v392 = vunpack.c.l.b16 %v328
      %v393 = vunpack.c.h.b16 %v328
      %v394 = vunpack.c.l.b16 %v329
      %v395 = vunpack.c.h.b16 %v329
      %v396 = vpack.c.b16 %v384, %v380
      %v397 = vpack.c.b16 %v385, %v381
      %v398 = vpack.c.b16 %v386, %v382
      %v399 = vpack.c.b16 %v387, %v383
      %v400 = vpack.c.b16 %v392, %v388
      %v401 = vpack.c.b16 %v393, %v389
      %v402 = vpack.c.b16 %v394, %v390
      %v403 = vpack.c.b16 %v395, %v391
      %vm412 = vcmask 261120
      %v414 = vsel %vm412, %v368, 0
      %v417 = vsel %vm412, %v369, 0
      %v420 = vsel %vm412, %v370, 0
      %v423 = vsel %vm412, %v371, 0
      %425 = vmatprep.subr.bf16.mxu0 %v397
      %426 = vmatpush1.bf16.msra.mxu0 %v396
      %427 = vmatprep.subr.bf16.mxu0 %v401
      %428 = vmatpush1.bf16.msra.mxu0 %v400
      %429 = vmatprep.subr.bf16.mxu0 0
      %430 = vmatpush1.bf16.msra.mxu0 0
      %431 = vmatprep.subr.bf16.mxu0 0
      %432 = vmatpush1.bf16.msra.mxu0 0
      %433 = vmatprep.subr.bf16.mxu0 0
      %434 = vmatpush1.bf16.msra.mxu0 0
      %435 = vmatprep.subr.bf16.mxu0 0
      %436 = vmatpush1.bf16.msra.mxu0 0
      %437 = vmatprep.subr.bf16.mxu0 0
      %438 = vmatpush1.bf16.msra.mxu0 0
      %439 = vmatprep.subr.bf16.mxu0 0
      %440 = vmatpush1.bf16.msra.mxu0 0
      %441 = vmatprep.subr.bf16.mxu0 0
      %442 = vmatpush1.bf16.msra.mxu0 0
      %443 = vmatprep.subr.bf16.mxu0 0
      %444 = vmatpush1.bf16.msra.mxu0 0
      %445 = vmatprep.subr.bf16.mxu0 0
      %446 = vmatpush1.bf16.msra.mxu0 0
      %447 = vmatprep.subr.bf16.mxu0 0
      %448 = vmatpush1.bf16.msra.mxu0 0
      %449 = vmatprep.subr.bf16.mxu0 0
      %450 = vmatpush1.bf16.msra.mxu0 0
      %451 = vmatprep.subr.bf16.mxu0 0
      %452 = vmatpush1.bf16.msra.mxu0 0
      %453 = vmatprep.subr.bf16.mxu0 0
      %454 = vmatpush1.bf16.msra.mxu0 0
      %455 = vmatprep.subr.bf16.mxu0 0
      %456 = vmatpush1.bf16.msra.mxu0 0
      %457 = vmatprep.mubr.bf16.mxu0 0
      %458 = vmatmul.mubr.bf16.gmra.mrb[0].mxu0 %v414
      %v459 = vpop.f32.mrb[0].mxu0
      %v460 = vadd.f32 %v335, %v459
      %v461 = vpop.f32.mrb[0].mxu0
      %v462 = vadd.f32 %v339, %v461
      %v463 = vpop.f32.mrb[0].mxu0
      %v464 = vadd.f32 %v335, %v463
      %v465 = vpop.f32.mrb[0].mxu0
      %v466 = vadd.f32 %v339, %v465
      %467 = vmatprep.mubr.bf16.mxu0 0
      %468 = vmatmul.mubr.bf16.gmra.mrb[0].mxu0 %v417
      %v469 = vpop.f32.mrb[0].mxu0
      %v470 = vadd.f32 %v335, %v469
      %v471 = vpop.f32.mrb[0].mxu0
      %v472 = vadd.f32 %v339, %v471
      %v473 = vpop.f32.mrb[0].mxu0
      %v474 = vadd.f32 %v335, %v473
      %v475 = vpop.f32.mrb[0].mxu0
      %v476 = vadd.f32 %v339, %v475
      %477 = vmatprep.mubr.bf16.mxu0 0
      %478 = vmatmul.mubr.bf16.gmra.mrb[0].mxu0 %v420
      %v479 = vpop.f32.mrb[0].mxu0
      %v480 = vadd.f32 %v335, %v479
      %v481 = vpop.f32.mrb[0].mxu0
      %v482 = vadd.f32 %v339, %v481
      %v483 = vpop.f32.mrb[0].mxu0
      %v484 = vadd.f32 %v335, %v483
      %v485 = vpop.f32.mrb[0].mxu0
      %v486 = vadd.f32 %v339, %v485
      %487 = vmatprep.mubr.bf16.mxu0 0
      %488 = vmatmul.mubr.bf16.gmra.mrb[0].mxu0 %v423
      %v489 = vpop.f32.mrb[0].mxu0
      %v490 = vadd.f32 %v335, %v489
      %v491 = vpop.f32.mrb[0].mxu0
      %v492 = vadd.f32 %v339, %v491
      %v493 = vpop.f32.mrb[0].mxu0
      %v494 = vadd.f32 %v335, %v493
      %v495 = vpop.f32.mrb[0].mxu0
      %v496 = vadd.f32 %v339, %v495
      %497 = vdwg.mxu0
      %498 = vmatprep.subr.bf16.mxu0 %v399
      %499 = vmatpush1.bf16.msra.mxu0 %v398
      %500 = vmatprep.subr.bf16.mxu0 %v403
      %501 = vmatpush1.bf16.msra.mxu0 %v402
      %502 = vmatprep.subr.bf16.mxu0 0
      %503 = vmatpush1.bf16.msra.mxu0 0
      %504 = vmatprep.subr.bf16.mxu0 0
      %505 = vmatpush1.bf16.msra.mxu0 0
      %506 = vmatprep.subr.bf16.mxu0 0
      %507 = vmatpush1.bf16.msra.mxu0 0
      %508 = vmatprep.subr.bf16.mxu0 0
      %509 = vmatpush1.bf16.msra.mxu0 0
      %510 = vmatprep.subr.bf16.mxu0 0
      %511 = vmatpush1.bf16.msra.mxu0 0
      %512 = vmatprep.subr.bf16.mxu0 0
      %513 = vmatpush1.bf16.msra.mxu0 0
      %514 = vmatprep.subr.bf16.mxu0 0
      %515 = vmatpush1.bf16.msra.mxu0 0
      %516 = vmatprep.subr.bf16.mxu0 0
      %517 = vmatpush1.bf16.msra.mxu0 0
      %518 = vmatprep.subr.bf16.mxu0 0
      %519 = vmatpush1.bf16.msra.mxu0 0
      %520 = vmatprep.subr.bf16.mxu0 0
      %521 = vmatpush1.bf16.msra.mxu0 0
      %522 = vmatprep.subr.bf16.mxu0 0
      %523 = vmatpush1.bf16.msra.mxu0 0
      %524 = vmatprep.subr.bf16.mxu0 0
      %525 = vmatpush1.bf16.msra.mxu0 0
      %526 = vmatprep.subr.bf16.mxu0 0
      %527 = vmatpush1.bf16.msra.mxu0 0
      %528 = vmatprep.subr.bf16.mxu0 0
      %529 = vmatpush1.bf16.msra.mxu0 0
      %530 = vmatprep.mubr.bf16.mxu0 0
      %531 = vmatmul.mubr.bf16.gmra.mrb[0].mxu0 %v414
      %v532 = vpop.f32.mrb[0].mxu0
      %v533 = vadd.f32 %v343, %v532
      %v534 = vpop.f32.mrb[0].mxu0
      %v535 = vadd.f32 %v347, %v534
      %v536 = vpop.f32.mrb[0].mxu0
      %v537 = vadd.f32 %v343, %v536
      %v538 = vpop.f32.mrb[0].mxu0
      %v539 = vadd.f32 %v347, %v538
      %540 = vmatprep.mubr.bf16.mxu0 0
      %541 = vmatmul.mubr.bf16.gmra.mrb[0].mxu0 %v417
      %v542 = vpop.f32.mrb[0].mxu0
      %v543 = vadd.f32 %v343, %v542
      %v544 = vpop.f32.mrb[0].mxu0
      %v545 = vadd.f32 %v347, %v544
      %v546 = vpop.f32.mrb[0].mxu0
      %v547 = vadd.f32 %v343, %v546
      %v548 = vpop.f32.mrb[0].mxu0
      %v549 = vadd.f32 %v347, %v548
      %550 = vmatprep.mubr.bf16.mxu0 0
      %551 = vmatmul.mubr.bf16.gmra.mrb[0].mxu0 %v420
      %v552 = vpop.f32.mrb[0].mxu0
      %v553 = vadd.f32 %v343, %v552
      %v554 = vpop.f32.mrb[0].mxu0
      %v555 = vadd.f32 %v347, %v554
      %v556 = vpop.f32.mrb[0].mxu0
      %v557 = vadd.f32 %v343, %v556
      %v558 = vpop.f32.mrb[0].mxu0
      %v559 = vadd.f32 %v347, %v558
      %560 = vmatprep.mubr.bf16.mxu0 0
      %561 = vmatmul.mubr.bf16.gmra.mrb[0].mxu0 %v423
      %v562 = vpop.f32.mrb[0].mxu0
      %v563 = vadd.f32 %v343, %v562
      %v564 = vpop.f32.mrb[0].mxu0
      %v565 = vadd.f32 %v347, %v564
      %v566 = vpop.f32.mrb[0].mxu0
      %v567 = vadd.f32 %v343, %v566
      %v568 = vpop.f32.mrb[0].mxu0
      %v569 = vadd.f32 %v347, %v568
      %570 = vdwg.mxu0
      %v571 = vmax.f32 %v460, 0.0
      %v572 = vmax.f32 %v462, 0.0
      %v573 = vmax.f32 %v533, 0.0
      %v574 = vmax.f32 %v535, 0.0
      %v575 = vmax.f32 %v464, 0.0
      %v576 = vmax.f32 %v466, 0.0
      %v577 = vmax.f32 %v537, 0.0
      %v578 = vmax.f32 %v539, 0.0
      %v579 = vmax.f32 %v470, 0.0
      %v580 = vmax.f32 %v472, 0.0
      %v581 = vmax.f32 %v543, 0.0
      %v582 = vmax.f32 %v545, 0.0
      %v583 = vmax.f32 %v474, 0.0
      %v584 = vmax.f32 %v476, 0.0
      %v585 = vmax.f32 %v547, 0.0
      %v586 = vmax.f32 %v549, 0.0
      %v587 = vmax.f32 %v480, 0.0
      %v588 = vmax.f32 %v482, 0.0
      %v589 = vmax.f32 %v553, 0.0
      %v590 = vmax.f32 %v555, 0.0
      %v591 = vmax.f32 %v484, 0.0
      %v592 = vmax.f32 %v486, 0.0
      %v593 = vmax.f32 %v557, 0.0
      %v594 = vmax.f32 %v559, 0.0
      %v595 = vmax.f32 %v490, 0.0
      %v596 = vmax.f32 %v492, 0.0
      %v597 = vmax.f32 %v563, 0.0
      %v598 = vmax.f32 %v565, 0.0
      %v599 = vmax.f32 %v494, 0.0
      %v600 = vmax.f32 %v496, 0.0
      %v601 = vmax.f32 %v567, 0.0
      %v602 = vmax.f32 %v569, 0.0
      %p603 = scmp.ne.s32.totalorder %s23, 0
      // Predicated region
      $region53: #{base_net_forward.1} parent=47 // pred_check
        %p604 = pneg %p603
      $region54: #{base_net_forward.1} parent=47 // pred_check_branch
        %606 = sbr.rel (%p604) target = $region56
      $region55: #{base_net_forward.1} parent=47 // pred_region
        %v607 = vld [vmem:[#allocation2] sm:$0xff]
        %v608 = vld [vmem:[#allocation2 + $0x8] sm:$0xff]
        %v609 = vld [vmem:[#allocation2 + $0x10] sm:$0xff]
        %v610 = vld [vmem:[#allocation2 + $0x18] sm:$0xff]
        %v611 = vadd.f32 %v571, %v575
        %v612 = vadd.f32 %v611, %v579
        %v613 = vadd.f32 %v612, %v583
        %v614 = vadd.f32 %v613, %v587
        %v615 = vadd.f32 %v614, %v591
        %v616 = vadd.f32 %v615, %v595
        %v617 = vadd.f32 %v616, %v599
        %v618 = vadd.f32 %v572, %v576
        %v619 = vadd.f32 %v618, %v580
        %v620 = vadd.f32 %v619, %v584
        %v621 = vadd.f32 %v620, %v588
        %v622 = vadd.f32 %v621, %v592
        %v623 = vadd.f32 %v622, %v596
        %v624 = vadd.f32 %v623, %v600
        %v625 = vadd.f32 %v573, %v577
        %v626 = vadd.f32 %v625, %v581
        %v627 = vadd.f32 %v626, %v585
        %v628 = vadd.f32 %v627, %v589
        %v629 = vadd.f32 %v628, %v593
        %v630 = vadd.f32 %v629, %v597
        %v631 = vadd.f32 %v630, %v601
        %v632 = vadd.f32 %v574, %v578
        %v633 = vadd.f32 %v632, %v582
        %v634 = vadd.f32 %v633, %v586
        %v635 = vadd.f32 %v634, %v590
        %v636 = vadd.f32 %v635, %v594
        %v637 = vadd.f32 %v636, %v598
        %v638 = vadd.f32 %v637, %v602
        %v639 = vadd.f32 %v607, %v617
        %v640 = vadd.f32 %v608, %v624
        %v641 = vadd.f32 %v609, %v631
        %v642 = vadd.f32 %v610, %v638
        %643 = vst [vmem:[#allocation2] sm:$0xff] %v639
        %644 = vst [vmem:[#allocation2 + $0x8] sm:$0xff] %v640
        %645 = vst [vmem:[#allocation2 + $0x10] sm:$0xff] %v641
        %646 = vst [vmem:[#allocation2 + $0x18] sm:$0xff] %v642
      $region56: #{base_net_forward.1} parent=47 // pred_fallthru
        _
      // Predicated region
      $region57: #{base_net_forward.1} parent=47 // pred_check
        %p647 = pneg %p306
      $region58: #{base_net_forward.1} parent=47 // pred_check_branch
        %649 = sbr.rel (%p647) target = $region60
      $region59: #{base_net_forward.1} parent=47 // pred_region
        %s650 = smul.u32 %s23, 64
        %v651 = vlaneseq
        %v652 = vshrl.u32 %v651, 7
        %v653 = vadd.s32 %v652, 8
        %v654 = vadd.s32 %v652, 16
        %v655 = vadd.s32 %v652, 24
        %v656 = vadd.s32 %v652, 32
        %v657 = vadd.s32 %v652, 40
        %v658 = vadd.s32 %v652, 48
        %v659 = vadd.s32 %v652, 56
        %v660 = vstv %s650
        %v661 = vadd.s32 %v660, %v652
        %v662 = vadd.s32 %v660, %v653
        %v663 = vadd.s32 %v660, %v654
        %v664 = vadd.s32 %v660, %v655
        %v665 = vadd.s32 %v660, %v656
        %v666 = vadd.s32 %v660, %v657
        %v667 = vadd.s32 %v660, %v658
        %v668 = vadd.s32 %v660, %v659
        %vm669 = vcmp.lt.s32.totalorder %v661, 64
        %vm670 = vcmp.lt.s32.totalorder %v662, 64
        %vm671 = vcmp.lt.s32.totalorder %v663, 64
        %vm672 = vcmp.lt.s32.totalorder %v664, 64
        %vm673 = vcmp.lt.s32.totalorder %v665, 64
        %vm674 = vcmp.lt.s32.totalorder %v666, 64
        %vm675 = vcmp.lt.s32.totalorder %v667, 64
        %vm676 = vcmp.lt.s32.totalorder %v668, 64
        %v677 = vsel %vm669, 1, 0
        %v678 = vsel %vm670, 1, 0
        %v679 = vsel %vm671, 1, 0
        %v680 = vsel %vm672, 1, 0
        %v681 = vsel %vm673, 1, 0
        %v682 = vsel %vm674, 1, 0
        %v683 = vsel %vm675, 1, 0
        %v684 = vsel %vm676, 1, 0
        %vm685 = vcmp.eq.s32.totalorder %v677, 1
        %vm686 = vcmp.eq.s32.totalorder %v678, 1
        %vm687 = vcmp.eq.s32.totalorder %v679, 1
        %vm688 = vcmp.eq.s32.totalorder %v680, 1
        %vm689 = vcmp.eq.s32.totalorder %v681, 1
        %vm690 = vcmp.eq.s32.totalorder %v682, 1
        %vm691 = vcmp.eq.s32.totalorder %v683, 1
        %vm692 = vcmp.eq.s32.totalorder %v684, 1
        %v693 = vsel %vm685, %v571, 0.0
        %v694 = vsel %vm685, %v572, 0.0
        %v695 = vsel %vm685, %v573, 0.0
        %v696 = vsel %vm685, %v574, 0.0
        %v697 = vsel %vm686, %v575, 0.0
        %v698 = vsel %vm686, %v576, 0.0
        %v699 = vsel %vm686, %v577, 0.0
        %v700 = vsel %vm686, %v578, 0.0
        %v701 = vsel %vm687, %v579, 0.0
        %v702 = vsel %vm687, %v580, 0.0
        %v703 = vsel %vm687, %v581, 0.0
        %v704 = vsel %vm687, %v582, 0.0
        %v705 = vsel %vm688, %v583, 0.0
        %v706 = vsel %vm688, %v584, 0.0
        %v707 = vsel %vm688, %v585, 0.0
        %v708 = vsel %vm688, %v586, 0.0
        %v709 = vsel %vm689, %v587, 0.0
        %v710 = vsel %vm689, %v588, 0.0
        %v711 = vsel %vm689, %v589, 0.0
        %v712 = vsel %vm689, %v590, 0.0
        %v713 = vsel %vm690, %v591, 0.0
        %v714 = vsel %vm690, %v592, 0.0
        %v715 = vsel %vm690, %v593, 0.0
        %v716 = vsel %vm690, %v594, 0.0
        %v717 = vsel %vm691, %v595, 0.0
        %v718 = vsel %vm691, %v596, 0.0
        %v719 = vsel %vm691, %v597, 0.0
        %v720 = vsel %vm691, %v598, 0.0
        %v721 = vsel %vm692, %v599, 0.0
        %v722 = vsel %vm692, %v600, 0.0
        %v723 = vsel %vm692, %v601, 0.0
        %v724 = vsel %vm692, %v602, 0.0
        %v725 = vld [vmem:[#allocation2] sm:$0xff]
        %v726 = vld [vmem:[#allocation2 + $0x8] sm:$0xff]
        %v727 = vld [vmem:[#allocation2 + $0x10] sm:$0xff]
        %v728 = vld [vmem:[#allocation2 + $0x18] sm:$0xff]
        %v729 = vadd.f32 %v693, %v697
        %v730 = vadd.f32 %v729, %v701
        %v731 = vadd.f32 %v730, %v705
        %v732 = vadd.f32 %v731, %v709
        %v733 = vadd.f32 %v732, %v713
        %v734 = vadd.f32 %v733, %v717
        %v735 = vadd.f32 %v734, %v721
        %v736 = vadd.f32 %v694, %v698
        %v737 = vadd.f32 %v736, %v702
        %v738 = vadd.f32 %v737, %v706
        %v739 = vadd.f32 %v738, %v710
        %v740 = vadd.f32 %v739, %v714
        %v741 = vadd.f32 %v740, %v718
        %v742 = vadd.f32 %v741, %v722
        %v743 = vadd.f32 %v695, %v699
        %v744 = vadd.f32 %v743, %v703
        %v745 = vadd.f32 %v744, %v707
        %v746 = vadd.f32 %v745, %v711
        %v747 = vadd.f32 %v746, %v715
        %v748 = vadd.f32 %v747, %v719
        %v749 = vadd.f32 %v748, %v723
        %v750 = vadd.f32 %v696, %v700
        %v751 = vadd.f32 %v750, %v704
        %v752 = vadd.f32 %v751, %v708
        %v753 = vadd.f32 %v752, %v712
        %v754 = vadd.f32 %v753, %v716
        %v755 = vadd.f32 %v754, %v720
        %v756 = vadd.f32 %v755, %v724
        %v757 = vadd.f32 %v725, %v735
        %v758 = vadd.f32 %v726, %v742
        %v759 = vadd.f32 %v727, %v749
        %v760 = vadd.f32 %v728, %v756
        %761 = vst [vmem:[#allocation2] sm:$0xff] %v757
        %762 = vst [vmem:[#allocation2 + $0x8] sm:$0xff] %v758
        %763 = vst [vmem:[#allocation2 + $0x10] sm:$0xff] %v759
        %764 = vst [vmem:[#allocation2 + $0x18] sm:$0xff] %v760
        %v765 = vld [vmem:[#allocation2] sm:$0xff]
        %v766 = vld [vmem:[#allocation2 + $0x8] sm:$0xff]
        %v767 = vld [vmem:[#allocation2 + $0x10] sm:$0xff]
        %v768 = vld [vmem:[#allocation2 + $0x18] sm:$0xff]
        %v769 = vrot.slane %v765, 4
        %v770 = vadd.f32 %v765, %v769
        %v771 = vrot.slane %v770, 2
        %v772 = vadd.f32 %v770, %v771
        %v773 = vrot.slane %v772, 1
        %v774 = vadd.f32 %v772, %v773
        %v775 = vrot.slane %v766, 4
        %v776 = vadd.f32 %v766, %v775
        %v777 = vrot.slane %v776, 2
        %v778 = vadd.f32 %v776, %v777
        %v779 = vrot.slane %v778, 1
        %v780 = vadd.f32 %v778, %v779
        %v781 = vrot.slane %v767, 4
        %v782 = vadd.f32 %v767, %v781
        %v783 = vrot.slane %v782, 2
        %v784 = vadd.f32 %v782, %v783
        %v785 = vrot.slane %v784, 1
        %v786 = vadd.f32 %v784, %v785
        %v787 = vrot.slane %v768, 4
        %v788 = vadd.f32 %v768, %v787
        %v789 = vrot.slane %v788, 2
        %v790 = vadd.f32 %v788, %v789
        %v791 = vrot.slane %v790, 1
        %v792 = vadd.f32 %v790, %v791
        %v793 = vmul.f32 %v774, 0.015625
        %v794 = vmul.f32 %v780, 0.015625
        %v795 = vmul.f32 %v786, 0.015625
        %v796 = vmul.f32 %v792, 0.015625
        %v797 = vpack.c.bf16 %v793, %v793
        %v798 = vpack.c.bf16 %v794, %v794
        %v799 = vpack.c.bf16 %v795, %v795
        %v800 = vpack.c.bf16 %v796, %v796
        %v801 = vld [vmem:[%s3] sm:$0xff]
        %v802 = vld [vmem:[%s3 + $0x8] sm:$0xff]
        %v803 = vld [vmem:[%s3 + $0x10] sm:$0xff]
        %v804 = vld [vmem:[%s3 + $0x18] sm:$0xff]
        %v805 = vld [vmem:[%s3 + $0x20] sm:$0xff]
        %v806 = vld [vmem:[%s3 + $0x28] sm:$0xff]
        %v807 = vld [vmem:[%s3 + $0x30] sm:$0xff]
        %v808 = vld [vmem:[%s3 + $0x38] sm:$0xff]
        %v809 = vld [vmem:[%s3 + $0x40] sm:$0xff]
        %v810 = vld [vmem:[%s3 + $0x48] sm:$0xff]
        %v811 = vld [vmem:[%s3 + $0x50] sm:$0xff]
        %v812 = vld [vmem:[%s3 + $0x58] sm:$0xff]
        %v813 = vld [vmem:[%s3 + $0x60] sm:$0xff]
        %v814 = vld [vmem:[%s3 + $0x68] sm:$0xff]
        %v815 = vld [vmem:[%s3 + $0x70] sm:$0xff]
        %v816 = vld [vmem:[%s3 + $0x78] sm:$0xff]
        %v817 = vld [vmem:[%s3 + $0x80] sm:$0xff]
        %v818 = vld [vmem:[%s3 + $0x88] sm:$0xff]
        %v819 = vld [vmem:[%s3 + $0x90] sm:$0xff]
        %v820 = vld [vmem:[%s3 + $0x98] sm:$0xff]
        %v821 = vld [vmem:[%s3 + $0xa0] sm:$0xff]
        %v822 = vld [vmem:[%s3 + $0xa8] sm:$0xff]
        %v823 = vld [vmem:[%s3 + $0xb0] sm:$0xff]
        %v824 = vld [vmem:[%s3 + $0xb8] sm:$0xff]
        %v825 = vld [vmem:[%s3 + $0xc0] sm:$0xff]
        %v826 = vld [vmem:[%s3 + $0xc8] sm:$0xff]
        %v827 = vld [vmem:[%s3 + $0xd0] sm:$0xff]
        %v828 = vld [vmem:[%s3 + $0xd8] sm:$0xff]
        %v829 = vld [vmem:[%s3 + $0xe0] sm:$0xff]
        %v830 = vld [vmem:[%s3 + $0xe8] sm:$0xff]
        %v831 = vld [vmem:[%s3 + $0xf0] sm:$0xff]
        %v832 = vld [vmem:[%s3 + $0xf8] sm:$0xff]
        %v833 = vld [vmem:[%s3 + $0x100] sm:$0xff]
        %v834 = vld [vmem:[%s3 + $0x108] sm:$0xff]
        %v835 = vld [vmem:[%s3 + $0x110] sm:$0xff]
        %v836 = vld [vmem:[%s3 + $0x118] sm:$0xff]
        %v837 = vld [vmem:[%s3 + $0x120] sm:$0xff]
        %v838 = vld [vmem:[%s3 + $0x128] sm:$0xff]
        %v839 = vld [vmem:[%s3 + $0x130] sm:$0xff]
        %v840 = vld [vmem:[%s3 + $0x138] sm:$0xff]
        %v841 = vld [vmem:[%s3 + $0x140] sm:$0xff]
        %v842 = vld [vmem:[%s3 + $0x148] sm:$0xff]
        %v843 = vld [vmem:[%s3 + $0x150] sm:$0xff]
        %v844 = vld [vmem:[%s3 + $0x158] sm:$0xff]
        %v845 = vld [vmem:[%s3 + $0x160] sm:$0xff]
        %v846 = vld [vmem:[%s3 + $0x168] sm:$0xff]
        %v847 = vld [vmem:[%s3 + $0x170] sm:$0xff]
        %v848 = vld [vmem:[%s3 + $0x178] sm:$0xff]
        %v849 = vld [vmem:[%s3 + $0x180] sm:$0xff]
        %v850 = vld [vmem:[%s3 + $0x188] sm:$0xff]
        %v851 = vld [vmem:[%s3 + $0x190] sm:$0xff]
        %v852 = vld [vmem:[%s3 + $0x198] sm:$0xff]
        %v853 = vld [vmem:[%s3 + $0x1a0] sm:$0xff]
        %v854 = vld [vmem:[%s3 + $0x1a8] sm:$0xff]
        %v855 = vld [vmem:[%s3 + $0x1b0] sm:$0xff]
        %v856 = vld [vmem:[%s3 + $0x1b8] sm:$0xff]
        %v857 = vld [vmem:[%s3 + $0x1c0] sm:$0xff]
        %v858 = vld [vmem:[%s3 + $0x1c8] sm:$0xff]
        %v859 = vld [vmem:[%s3 + $0x1d0] sm:$0xff]
        %v860 = vld [vmem:[%s3 + $0x1d8] sm:$0xff]
        %v861 = vld [vmem:[%s3 + $0x1e0] sm:$0xff]
        %v862 = vld [vmem:[%s3 + $0x1e8] sm:$0xff]
        %v863 = vld [vmem:[%s3 + $0x1f0] sm:$0xff]
        %v864 = vld [vmem:[%s3 + $0x1f8] sm:$0xff]
        %v865 = vld [vmem:[%s3 + $0x200] sm:$0xff]
        %v866 = vld [vmem:[%s3 + $0x208] sm:$0xff]
        %v867 = vld [vmem:[%s3 + $0x210] sm:$0xff]
        %v868 = vld [vmem:[%s3 + $0x218] sm:$0xff]
        %v869 = vld [vmem:[%s3 + $0x220] sm:$0xff]
        %v870 = vld [vmem:[%s3 + $0x228] sm:$0xff]
        %v871 = vld [vmem:[%s3 + $0x230] sm:$0xff]
        %v872 = vld [vmem:[%s3 + $0x238] sm:$0xff]
        %v873 = vld [vmem:[%s3 + $0x240] sm:$0xff]
        %v874 = vld [vmem:[%s3 + $0x248] sm:$0xff]
        %v875 = vld [vmem:[%s3 + $0x250] sm:$0xff]
        %v876 = vld [vmem:[%s3 + $0x258] sm:$0xff]
        %v877 = vld [vmem:[%s3 + $0x260] sm:$0xff]
        %v878 = vld [vmem:[%s3 + $0x268] sm:$0xff]
        %v879 = vld [vmem:[%s3 + $0x270] sm:$0xff]
        %v880 = vld [vmem:[%s3 + $0x278] sm:$0xff]
        %v881 = vld [vmem:[%s3 + $0x280] sm:$0xff]
        %v882 = vld [vmem:[%s3 + $0x288] sm:$0xff]
        %v883 = vld [vmem:[%s3 + $0x290] sm:$0xff]
        %v884 = vld [vmem:[%s3 + $0x298] sm:$0xff]
        %v885 = vld [vmem:[%s3 + $0x2a0] sm:$0xff]
        %v886 = vld [vmem:[%s3 + $0x2a8] sm:$0xff]
        %v887 = vld [vmem:[%s3 + $0x2b0] sm:$0xff]
        %v888 = vld [vmem:[%s3 + $0x2b8] sm:$0xff]
        %v889 = vld [vmem:[%s3 + $0x2c0] sm:$0xff]
        %v890 = vld [vmem:[%s3 + $0x2c8] sm:$0xff]
        %v891 = vld [vmem:[%s3 + $0x2d0] sm:$0xff]
        %v892 = vld [vmem:[%s3 + $0x2d8] sm:$0xff]
        %v893 = vld [vmem:[%s3 + $0x2e0] sm:$0xff]
        %v894 = vld [vmem:[%s3 + $0x2e8] sm:$0xff]
        %v895 = vld [vmem:[%s3 + $0x2f0] sm:$0xff]
        %v896 = vld [vmem:[%s3 + $0x2f8] sm:$0xff]
        %v897 = vld [vmem:[%s3 + $0x300] sm:$0xff]
        %v898 = vld [vmem:[%s3 + $0x308] sm:$0xff]
        %v899 = vld [vmem:[%s3 + $0x310] sm:$0xff]
        %v900 = vld [vmem:[%s3 + $0x318] sm:$0xff]
        %v901 = vld [vmem:[%s3 + $0x320] sm:$0xff]
        %v902 = vld [vmem:[%s3 + $0x328] sm:$0xff]
        %v903 = vld [vmem:[%s3 + $0x330] sm:$0xff]
        %v904 = vld [vmem:[%s3 + $0x338] sm:$0xff]
        %v905 = vld [vmem:[%s3 + $0x340] sm:$0xff]
        %v906 = vld [vmem:[%s3 + $0x348] sm:$0xff]
        %v907 = vld [vmem:[%s3 + $0x350] sm:$0xff]
        %v908 = vld [vmem:[%s3 + $0x358] sm:$0xff]
        %v909 = vld [vmem:[%s3 + $0x360] sm:$0xff]
        %v910 = vld [vmem:[%s3 + $0x368] sm:$0xff]
        %v911 = vld [vmem:[%s3 + $0x370] sm:$0xff]
        %v912 = vld [vmem:[%s3 + $0x378] sm:$0xff]
        %v913 = vld [vmem:[%s3 + $0x380] sm:$0xff]
        %v914 = vld [vmem:[%s3 + $0x388] sm:$0xff]
        %v915 = vld [vmem:[%s3 + $0x390] sm:$0xff]
        %v916 = vld [vmem:[%s3 + $0x398] sm:$0xff]
        %v917 = vld [vmem:[%s3 + $0x3a0] sm:$0xff]
        %v918 = vld [vmem:[%s3 + $0x3a8] sm:$0xff]
        %v919 = vld [vmem:[%s3 + $0x3b0] sm:$0xff]
        %v920 = vld [vmem:[%s3 + $0x3b8] sm:$0xff]
        %v921 = vld [vmem:[%s3 + $0x3c0] sm:$0xff]
        %v922 = vld [vmem:[%s3 + $0x3c8] sm:$0xff]
        %v923 = vld [vmem:[%s3 + $0x3d0] sm:$0xff]
        %v924 = vld [vmem:[%s3 + $0x3d8] sm:$0xff]
        %v925 = vld [vmem:[%s3 + $0x3e0] sm:$0xff]
        %v926 = vld [vmem:[%s3 + $0x3e8] sm:$0xff]
        %v927 = vld [vmem:[%s3 + $0x3f0] sm:$0xff]
        %v928 = vld [vmem:[%s3 + $0x3f8] sm:$0xff]
        %v929 = vld [vmem:[%s3 + $0x400] sm:$0xff]
        %v930 = vld [vmem:[%s3 + $0x408] sm:$0xff]
        %v931 = vld [vmem:[%s3 + $0x410] sm:$0xff]
        %v932 = vld [vmem:[%s3 + $0x418] sm:$0xff]
        %v933 = vld [vmem:[%s3 + $0x420] sm:$0xff]
        %v934 = vld [vmem:[%s3 + $0x428] sm:$0xff]
        %v935 = vld [vmem:[%s3 + $0x430] sm:$0xff]
        %v936 = vld [vmem:[%s3 + $0x438] sm:$0xff]
        %v937 = vld [vmem:[%s3 + $0x440] sm:$0xff]
        %v938 = vld [vmem:[%s3 + $0x448] sm:$0xff]
        %v939 = vld [vmem:[%s3 + $0x450] sm:$0xff]
        %v940 = vld [vmem:[%s3 + $0x458] sm:$0xff]
        %v941 = vld [vmem:[%s3 + $0x460] sm:$0xff]
        %v942 = vld [vmem:[%s3 + $0x468] sm:$0xff]
        %v943 = vld [vmem:[%s3 + $0x470] sm:$0xff]
        %v944 = vld [vmem:[%s3 + $0x478] sm:$0xff]
        %v945 = vld [vmem:[%s3 + $0x480] sm:$0xff]
        %v946 = vld [vmem:[%s3 + $0x488] sm:$0xff]
        %v947 = vld [vmem:[%s3 + $0x490] sm:$0xff]
        %v948 = vld [vmem:[%s3 + $0x498] sm:$0xff]
        %v949 = vld [vmem:[%s3 + $0x4a0] sm:$0xff]
        %v950 = vld [vmem:[%s3 + $0x4a8] sm:$0xff]
        %v951 = vld [vmem:[%s3 + $0x4b0] sm:$0xff]
        %v952 = vld [vmem:[%s3 + $0x4b8] sm:$0xff]
        %v953 = vld [vmem:[%s3 + $0x4c0] sm:$0xff]
        %v954 = vld [vmem:[%s3 + $0x4c8] sm:$0xff]
        %v955 = vld [vmem:[%s3 + $0x4d0] sm:$0xff]
        %v956 = vld [vmem:[%s3 + $0x4d8] sm:$0xff]
        %v957 = vld [vmem:[%s3 + $0x4e0] sm:$0xff]
        %v958 = vld [vmem:[%s3 + $0x4e8] sm:$0xff]
        %v959 = vld [vmem:[%s3 + $0x4f0] sm:$0xff]
        %v960 = vld [vmem:[%s3 + $0x4f8] sm:$0xff]
        %v961 = vld [vmem:[%s3 + $0x500] sm:$0xff]
        %v962 = vld [vmem:[%s3 + $0x508] sm:$0xff]
        %v963 = vld [vmem:[%s3 + $0x510] sm:$0xff]
        %v964 = vld [vmem:[%s3 + $0x518] sm:$0xff]
        %v965 = vld [vmem:[%s3 + $0x520] sm:$0xff]
        %v966 = vld [vmem:[%s3 + $0x528] sm:$0xff]
        %v967 = vld [vmem:[%s3 + $0x530] sm:$0xff]
        %v968 = vld [vmem:[%s3 + $0x538] sm:$0xff]
        %v969 = vld [vmem:[%s3 + $0x540] sm:$0xff]
        %v970 = vld [vmem:[%s3 + $0x548] sm:$0xff]
        %v971 = vld [vmem:[%s3 + $0x550] sm:$0xff]
        %v972 = vld [vmem:[%s3 + $0x558] sm:$0xff]
        %v973 = vld [vmem:[%s3 + $0x560] sm:$0xff]
        %v974 = vld [vmem:[%s3 + $0x568] sm:$0xff]
        %v975 = vld [vmem:[%s3 + $0x570] sm:$0xff]
        %v976 = vld [vmem:[%s3 + $0x578] sm:$0xff]
        %v977 = vld [vmem:[%s3 + $0x580] sm:$0xff]
        %v978 = vld [vmem:[%s3 + $0x588] sm:$0xff]
        %v979 = vld [vmem:[%s3 + $0x590] sm:$0xff]
        %v980 = vld [vmem:[%s3 + $0x598] sm:$0xff]
        %v981 = vld [vmem:[%s3 + $0x5a0] sm:$0xff]
        %v982 = vld [vmem:[%s3 + $0x5a8] sm:$0xff]
        %v983 = vld [vmem:[%s3 + $0x5b0] sm:$0xff]
        %v984 = vld [vmem:[%s3 + $0x5b8] sm:$0xff]
        %v985 = vld [vmem:[%s3 + $0x5c0] sm:$0xff]
        %v986 = vld [vmem:[%s3 + $0x5c8] sm:$0xff]
        %v987 = vld [vmem:[%s3 + $0x5d0] sm:$0xff]
        %v988 = vld [vmem:[%s3 + $0x5d8] sm:$0xff]
        %v989 = vld [vmem:[%s3 + $0x5e0] sm:$0xff]
        %v990 = vld [vmem:[%s3 + $0x5e8] sm:$0xff]
        %v991 = vld [vmem:[%s3 + $0x5f0] sm:$0xff]
        %v992 = vld [vmem:[%s3 + $0x5f8] sm:$0xff]
        %v993 = vld [vmem:[%s3 + $0x600] sm:$0xff]
        %v994 = vld [vmem:[%s3 + $0x608] sm:$0xff]
        %v995 = vld [vmem:[%s3 + $0x610] sm:$0xff]
        %v996 = vld [vmem:[%s3 + $0x618] sm:$0xff]
        %v997 = vld [vmem:[%s3 + $0x620] sm:$0xff]
        %v998 = vld [vmem:[%s3 + $0x628] sm:$0xff]
        %v999 = vld [vmem:[%s3 + $0x630] sm:$0xff]
        %v1000 = vld [vmem:[%s3 + $0x638] sm:$0xff]
        %v1001 = vld [vmem:[%s3 + $0x640] sm:$0xff]
        %v1002 = vld [vmem:[%s3 + $0x648] sm:$0xff]
        %v1003 = vld [vmem:[%s3 + $0x650] sm:$0xff]
        %v1004 = vld [vmem:[%s3 + $0x658] sm:$0xff]
        %v1005 = vld [vmem:[%s3 + $0x660] sm:$0xff]
        %v1006 = vld [vmem:[%s3 + $0x668] sm:$0xff]
        %v1007 = vld [vmem:[%s3 + $0x670] sm:$0xff]
        %v1008 = vld [vmem:[%s3 + $0x678] sm:$0xff]
        %v1009 = vld [vmem:[%s3 + $0x680] sm:$0xff]
        %v1010 = vld [vmem:[%s3 + $0x688] sm:$0xff]
        %v1011 = vld [vmem:[%s3 + $0x690] sm:$0xff]
        %v1012 = vld [vmem:[%s3 + $0x698] sm:$0xff]
        %v1013 = vld [vmem:[%s3 + $0x6a0] sm:$0xff]
        %v1014 = vld [vmem:[%s3 + $0x6a8] sm:$0xff]
        %v1015 = vld [vmem:[%s3 + $0x6b0] sm:$0xff]
        %v1016 = vld [vmem:[%s3 + $0x6b8] sm:$0xff]
        %v1017 = vld [vmem:[%s3 + $0x6c0] sm:$0xff]
        %v1018 = vld [vmem:[%s3 + $0x6c8] sm:$0xff]
        %v1019 = vld [vmem:[%s3 + $0x6d0] sm:$0xff]
        %v1020 = vld [vmem:[%s3 + $0x6d8] sm:$0xff]
        %v1021 = vld [vmem:[%s3 + $0x6e0] sm:$0xff]
        %v1022 = vld [vmem:[%s3 + $0x6e8] sm:$0xff]
        %v1023 = vld [vmem:[%s3 + $0x6f0] sm:$0xff]
        %v1024 = vld [vmem:[%s3 + $0x6f8] sm:$0xff]
        %v1025 = vld [vmem:[%s3 + $0x700] sm:$0xff]
        %v1026 = vld [vmem:[%s3 + $0x708] sm:$0xff]
        %v1027 = vld [vmem:[%s3 + $0x710] sm:$0xff]
        %v1028 = vld [vmem:[%s3 + $0x718] sm:$0xff]
        %v1029 = vld [vmem:[%s3 + $0x720] sm:$0xff]
        %v1030 = vld [vmem:[%s3 + $0x728] sm:$0xff]
        %v1031 = vld [vmem:[%s3 + $0x730] sm:$0xff]
        %v1032 = vld [vmem:[%s3 + $0x738] sm:$0xff]
        %v1033 = vld [vmem:[%s3 + $0x740] sm:$0xff]
        %v1034 = vld [vmem:[%s3 + $0x748] sm:$0xff]
        %v1035 = vld [vmem:[%s3 + $0x750] sm:$0xff]
        %v1036 = vld [vmem:[%s3 + $0x758] sm:$0xff]
        %v1037 = vld [vmem:[%s3 + $0x760] sm:$0xff]
        %v1038 = vld [vmem:[%s3 + $0x768] sm:$0xff]
        %v1039 = vld [vmem:[%s3 + $0x770] sm:$0xff]
        %v1040 = vld [vmem:[%s3 + $0x778] sm:$0xff]
        %v1041 = vld [vmem:[%s3 + $0x780] sm:$0xff]
        %v1042 = vld [vmem:[%s3 + $0x788] sm:$0xff]
        %v1043 = vld [vmem:[%s3 + $0x790] sm:$0xff]
        %v1044 = vld [vmem:[%s3 + $0x798] sm:$0xff]
        %v1045 = vld [vmem:[%s3 + $0x7a0] sm:$0xff]
        %v1046 = vld [vmem:[%s3 + $0x7a8] sm:$0xff]
        %v1047 = vld [vmem:[%s3 + $0x7b0] sm:$0xff]
        %v1048 = vld [vmem:[%s3 + $0x7b8] sm:$0xff]
        %v1049 = vld [vmem:[%s3 + $0x7c0] sm:$0xff]
        %v1050 = vld [vmem:[%s3 + $0x7c8] sm:$0xff]
        %v1051 = vld [vmem:[%s3 + $0x7d0] sm:$0xff]
        %v1052 = vld [vmem:[%s3 + $0x7d8] sm:$0xff]
        %v1053 = vld [vmem:[%s3 + $0x7e0] sm:$0xff]
        %v1054 = vld [vmem:[%s3 + $0x7e8] sm:$0xff]
        %v1055 = vld [vmem:[%s3 + $0x7f0] sm:$0xff]
        %v1056 = vld [vmem:[%s3 + $0x7f8] sm:$0xff]
        %v1057 = vld [vmem:[%s4] sm:$0xff]
        %v1314 = vunpack.c.l.b16 %v801
        %v1315 = vunpack.c.h.b16 %v801
        %v1316 = vunpack.c.l.b16 %v802
        %v1317 = vunpack.c.h.b16 %v802
        %v1318 = vunpack.c.l.b16 %v803
        %v1319 = vunpack.c.h.b16 %v803
        %v1320 = vunpack.c.l.b16 %v804
        %v1321 = vunpack.c.h.b16 %v804
        %v1322 = vunpack.c.l.b16 %v805
        %v1323 = vunpack.c.h.b16 %v805
        %v1324 = vunpack.c.l.b16 %v806
        %v1325 = vunpack.c.h.b16 %v806
        %v1326 = vunpack.c.l.b16 %v807
        %v1327 = vunpack.c.h.b16 %v807
        %v1328 = vunpack.c.l.b16 %v808
        %v1329 = vunpack.c.h.b16 %v808
        %v1330 = vunpack.c.l.b16 %v809
        %v1331 = vunpack.c.h.b16 %v809
        %v1332 = vunpack.c.l.b16 %v810
        %v1333 = vunpack.c.h.b16 %v810
        %v1334 = vunpack.c.l.b16 %v811
        %v1335 = vunpack.c.h.b16 %v811
        %v1336 = vunpack.c.l.b16 %v812
        %v1337 = vunpack.c.h.b16 %v812
        %v1338 = vunpack.c.l.b16 %v813
        %v1339 = vunpack.c.h.b16 %v813
        %v1340 = vunpack.c.l.b16 %v814
        %v1341 = vunpack.c.h.b16 %v814
        %v1342 = vunpack.c.l.b16 %v815
        %v1343 = vunpack.c.h.b16 %v815
        %v1344 = vunpack.c.l.b16 %v816
        %v1345 = vunpack.c.h.b16 %v816
        %v1346 = vunpack.c.l.b16 %v817
        %v1347 = vunpack.c.h.b16 %v817
        %v1348 = vunpack.c.l.b16 %v818
        %v1349 = vunpack.c.h.b16 %v818
        %v1350 = vunpack.c.l.b16 %v819
        %v1351 = vunpack.c.h.b16 %v819
        %v1352 = vunpack.c.l.b16 %v820
        %v1353 = vunpack.c.h.b16 %v820
        %v1354 = vunpack.c.l.b16 %v821
        %v1355 = vunpack.c.h.b16 %v821
        %v1356 = vunpack.c.l.b16 %v822
        %v1357 = vunpack.c.h.b16 %v822
        %v1358 = vunpack.c.l.b16 %v823
        %v1359 = vunpack.c.h.b16 %v823
        %v1360 = vunpack.c.l.b16 %v824
        %v1361 = vunpack.c.h.b16 %v824
        %v1362 = vunpack.c.l.b16 %v825
        %v1363 = vunpack.c.h.b16 %v825
        %v1364 = vunpack.c.l.b16 %v826
        %v1365 = vunpack.c.h.b16 %v826
        %v1366 = vunpack.c.l.b16 %v827
        %v1367 = vunpack.c.h.b16 %v827
        %v1368 = vunpack.c.l.b16 %v828
        %v1369 = vunpack.c.h.b16 %v828
        %v1370 = vunpack.c.l.b16 %v829
        %v1371 = vunpack.c.h.b16 %v829
        %v1372 = vunpack.c.l.b16 %v830
        %v1373 = vunpack.c.h.b16 %v830
        %v1374 = vunpack.c.l.b16 %v831
        %v1375 = vunpack.c.h.b16 %v831
        %v1376 = vunpack.c.l.b16 %v832
        %v1377 = vunpack.c.h.b16 %v832
        %v1378 = vunpack.c.l.b16 %v833
        %v1379 = vunpack.c.h.b16 %v833
        %v1380 = vunpack.c.l.b16 %v834
        %v1381 = vunpack.c.h.b16 %v834
        %v1382 = vunpack.c.l.b16 %v835
        %v1383 = vunpack.c.h.b16 %v835
        %v1384 = vunpack.c.l.b16 %v836
        %v1385 = vunpack.c.h.b16 %v836
        %v1386 = vunpack.c.l.b16 %v837
        %v1387 = vunpack.c.h.b16 %v837
        %v1388 = vunpack.c.l.b16 %v838
        %v1389 = vunpack.c.h.b16 %v838
        %v1390 = vunpack.c.l.b16 %v839
        %v1391 = vunpack.c.h.b16 %v839
        %v1392 = vunpack.c.l.b16 %v840
        %v1393 = vunpack.c.h.b16 %v840
        %v1394 = vunpack.c.l.b16 %v841
        %v1395 = vunpack.c.h.b16 %v841
        %v1396 = vunpack.c.l.b16 %v842
        %v1397 = vunpack.c.h.b16 %v842
        %v1398 = vunpack.c.l.b16 %v843
        %v1399 = vunpack.c.h.b16 %v843
        %v1400 = vunpack.c.l.b16 %v844
        %v1401 = vunpack.c.h.b16 %v844
        %v1402 = vunpack.c.l.b16 %v845
        %v1403 = vunpack.c.h.b16 %v845
        %v1404 = vunpack.c.l.b16 %v846
        %v1405 = vunpack.c.h.b16 %v846
        %v1406 = vunpack.c.l.b16 %v847
        %v1407 = vunpack.c.h.b16 %v847
        %v1408 = vunpack.c.l.b16 %v848
        %v1409 = vunpack.c.h.b16 %v848
        %v1410 = vunpack.c.l.b16 %v849
        %v1411 = vunpack.c.h.b16 %v849
        %v1412 = vunpack.c.l.b16 %v850
        %v1413 = vunpack.c.h.b16 %v850
        %v1414 = vunpack.c.l.b16 %v851
        %v1415 = vunpack.c.h.b16 %v851
        %v1416 = vunpack.c.l.b16 %v852
        %v1417 = vunpack.c.h.b16 %v852
        %v1418 = vunpack.c.l.b16 %v853
        %v1419 = vunpack.c.h.b16 %v853
        %v1420 = vunpack.c.l.b16 %v854
        %v1421 = vunpack.c.h.b16 %v854
        %v1422 = vunpack.c.l.b16 %v855
        %v1423 = vunpack.c.h.b16 %v855
        %v1424 = vunpack.c.l.b16 %v856
        %v1425 = vunpack.c.h.b16 %v856
        %v1426 = vunpack.c.l.b16 %v857
        %v1427 = vunpack.c.h.b16 %v857
        %v1428 = vunpack.c.l.b16 %v858
        %v1429 = vunpack.c.h.b16 %v858
        %v1430 = vunpack.c.l.b16 %v859
        %v1431 = vunpack.c.h.b16 %v859
        %v1432 = vunpack.c.l.b16 %v860
        %v1433 = vunpack.c.h.b16 %v860
        %v1434 = vunpack.c.l.b16 %v861
        %v1435 = vunpack.c.h.b16 %v861
        %v1436 = vunpack.c.l.b16 %v862
        %v1437 = vunpack.c.h.b16 %v862
        %v1438 = vunpack.c.l.b16 %v863
        %v1439 = vunpack.c.h.b16 %v863
        %v1440 = vunpack.c.l.b16 %v864
        %v1441 = vunpack.c.h.b16 %v864
        %v1442 = vunpack.c.l.b16 %v865
        %v1443 = vunpack.c.h.b16 %v865
        %v1444 = vunpack.c.l.b16 %v866
        %v1445 = vunpack.c.h.b16 %v866
        %v1446 = vunpack.c.l.b16 %v867
        %v1447 = vunpack.c.h.b16 %v867
        %v1448 = vunpack.c.l.b16 %v868
        %v1449 = vunpack.c.h.b16 %v868
        %v1450 = vunpack.c.l.b16 %v869
        %v1451 = vunpack.c.h.b16 %v869
        %v1452 = vunpack.c.l.b16 %v870
        %v1453 = vunpack.c.h.b16 %v870
        %v1454 = vunpack.c.l.b16 %v871
        %v1455 = vunpack.c.h.b16 %v871
        %v1456 = vunpack.c.l.b16 %v872
        %v1457 = vunpack.c.h.b16 %v872
        %v1458 = vunpack.c.l.b16 %v873
        %v1459 = vunpack.c.h.b16 %v873
        %v1460 = vunpack.c.l.b16 %v874
        %v1461 = vunpack.c.h.b16 %v874
        %v1462 = vunpack.c.l.b16 %v875
        %v1463 = vunpack.c.h.b16 %v875
        %v1464 = vunpack.c.l.b16 %v876
        %v1465 = vunpack.c.h.b16 %v876
        %v1466 = vunpack.c.l.b16 %v877
        %v1467 = vunpack.c.h.b16 %v877
        %v1468 = vunpack.c.l.b16 %v878
        %v1469 = vunpack.c.h.b16 %v878
        %v1470 = vunpack.c.l.b16 %v879
        %v1471 = vunpack.c.h.b16 %v879
        %v1472 = vunpack.c.l.b16 %v880
        %v1473 = vunpack.c.h.b16 %v880
        %v1474 = vunpack.c.l.b16 %v881
        %v1475 = vunpack.c.h.b16 %v881
        %v1476 = vunpack.c.l.b16 %v882
        %v1477 = vunpack.c.h.b16 %v882
        %v1478 = vunpack.c.l.b16 %v883
        %v1479 = vunpack.c.h.b16 %v883
        %v1480 = vunpack.c.l.b16 %v884
        %v1481 = vunpack.c.h.b16 %v884
        %v1482 = vunpack.c.l.b16 %v885
        %v1483 = vunpack.c.h.b16 %v885
        %v1484 = vunpack.c.l.b16 %v886
        %v1485 = vunpack.c.h.b16 %v886
        %v1486 = vunpack.c.l.b16 %v887
        %v1487 = vunpack.c.h.b16 %v887
        %v1488 = vunpack.c.l.b16 %v888
        %v1489 = vunpack.c.h.b16 %v888
        %v1490 = vunpack.c.l.b16 %v889
        %v1491 = vunpack.c.h.b16 %v889
        %v1492 = vunpack.c.l.b16 %v890
        %v1493 = vunpack.c.h.b16 %v890
        %v1494 = vunpack.c.l.b16 %v891
        %v1495 = vunpack.c.h.b16 %v891
        %v1496 = vunpack.c.l.b16 %v892
        %v1497 = vunpack.c.h.b16 %v892
        %v1498 = vunpack.c.l.b16 %v893
        %v1499 = vunpack.c.h.b16 %v893
        %v1500 = vunpack.c.l.b16 %v894
        %v1501 = vunpack.c.h.b16 %v894
        %v1502 = vunpack.c.l.b16 %v895
        %v1503 = vunpack.c.h.b16 %v895
        %v1504 = vunpack.c.l.b16 %v896
        %v1505 = vunpack.c.h.b16 %v896
        %v1506 = vunpack.c.l.b16 %v897
        %v1507 = vunpack.c.h.b16 %v897
        %v1508 = vunpack.c.l.b16 %v898
        %v1509 = vunpack.c.h.b16 %v898
        %v1510 = vunpack.c.l.b16 %v899
        %v1511 = vunpack.c.h.b16 %v899
        %v1512 = vunpack.c.l.b16 %v900
        %v1513 = vunpack.c.h.b16 %v900
        %v1514 = vunpack.c.l.b16 %v901
        %v1515 = vunpack.c.h.b16 %v901
        %v1516 = vunpack.c.l.b16 %v902
        %v1517 = vunpack.c.h.b16 %v902
        %v1518 = vunpack.c.l.b16 %v903
        %v1519 = vunpack.c.h.b16 %v903
        %v1520 = vunpack.c.l.b16 %v904
        %v1521 = vunpack.c.h.b16 %v904
        %v1522 = vunpack.c.l.b16 %v905
        %v1523 = vunpack.c.h.b16 %v905
        %v1524 = vunpack.c.l.b16 %v906
        %v1525 = vunpack.c.h.b16 %v906
        %v1526 = vunpack.c.l.b16 %v907
        %v1527 = vunpack.c.h.b16 %v907
        %v1528 = vunpack.c.l.b16 %v908
        %v1529 = vunpack.c.h.b16 %v908
        %v1530 = vunpack.c.l.b16 %v909
        %v1531 = vunpack.c.h.b16 %v909
        %v1532 = vunpack.c.l.b16 %v910
        %v1533 = vunpack.c.h.b16 %v910
        %v1534 = vunpack.c.l.b16 %v911
        %v1535 = vunpack.c.h.b16 %v911
        %v1536 = vunpack.c.l.b16 %v912
        %v1537 = vunpack.c.h.b16 %v912
        %v1538 = vunpack.c.l.b16 %v913
        %v1539 = vunpack.c.h.b16 %v913
        %v1540 = vunpack.c.l.b16 %v914
        %v1541 = vunpack.c.h.b16 %v914
        %v1542 = vunpack.c.l.b16 %v915
        %v1543 = vunpack.c.h.b16 %v915
        %v1544 = vunpack.c.l.b16 %v916
        %v1545 = vunpack.c.h.b16 %v916
        %v1546 = vunpack.c.l.b16 %v917
        %v1547 = vunpack.c.h.b16 %v917
        %v1548 = vunpack.c.l.b16 %v918
        %v1549 = vunpack.c.h.b16 %v918
        %v1550 = vunpack.c.l.b16 %v919
        %v1551 = vunpack.c.h.b16 %v919
        %v1552 = vunpack.c.l.b16 %v920
        %v1553 = vunpack.c.h.b16 %v920
        %v1554 = vunpack.c.l.b16 %v921
        %v1555 = vunpack.c.h.b16 %v921
        %v1556 = vunpack.c.l.b16 %v922
        %v1557 = vunpack.c.h.b16 %v922
        %v1558 = vunpack.c.l.b16 %v923
        %v1559 = vunpack.c.h.b16 %v923
        %v1560 = vunpack.c.l.b16 %v924
        %v1561 = vunpack.c.h.b16 %v924
        %v1562 = vunpack.c.l.b16 %v925
        %v1563 = vunpack.c.h.b16 %v925
        %v1564 = vunpack.c.l.b16 %v926
        %v1565 = vunpack.c.h.b16 %v926
        %v1566 = vunpack.c.l.b16 %v927
        %v1567 = vunpack.c.h.b16 %v927
        %v1568 = vunpack.c.l.b16 %v928
        %v1569 = vunpack.c.h.b16 %v928
        %v1570 = vunpack.c.l.b16 %v929
        %v1571 = vunpack.c.h.b16 %v929
        %v1572 = vunpack.c.l.b16 %v930
        %v1573 = vunpack.c.h.b16 %v930
        %v1574 = vunpack.c.l.b16 %v931
        %v1575 = vunpack.c.h.b16 %v931
        %v1576 = vunpack.c.l.b16 %v932
        %v1577 = vunpack.c.h.b16 %v932
        %v1578 = vunpack.c.l.b16 %v933
        %v1579 = vunpack.c.h.b16 %v933
        %v1580 = vunpack.c.l.b16 %v934
        %v1581 = vunpack.c.h.b16 %v934
        %v1582 = vunpack.c.l.b16 %v935
        %v1583 = vunpack.c.h.b16 %v935
        %v1584 = vunpack.c.l.b16 %v936
        %v1585 = vunpack.c.h.b16 %v936
        %v1586 = vunpack.c.l.b16 %v937
        %v1587 = vunpack.c.h.b16 %v937
        %v1588 = vunpack.c.l.b16 %v938
        %v1589 = vunpack.c.h.b16 %v938
        %v1590 = vunpack.c.l.b16 %v939
        %v1591 = vunpack.c.h.b16 %v939
        %v1592 = vunpack.c.l.b16 %v940
        %v1593 = vunpack.c.h.b16 %v940
        %v1594 = vunpack.c.l.b16 %v941
        %v1595 = vunpack.c.h.b16 %v941
        %v1596 = vunpack.c.l.b16 %v942
        %v1597 = vunpack.c.h.b16 %v942
        %v1598 = vunpack.c.l.b16 %v943
        %v1599 = vunpack.c.h.b16 %v943
        %v1600 = vunpack.c.l.b16 %v944
        %v1601 = vunpack.c.h.b16 %v944
        %v1602 = vunpack.c.l.b16 %v945
        %v1603 = vunpack.c.h.b16 %v945
        %v1604 = vunpack.c.l.b16 %v946
        %v1605 = vunpack.c.h.b16 %v946
        %v1606 = vunpack.c.l.b16 %v947
        %v1607 = vunpack.c.h.b16 %v947
        %v1608 = vunpack.c.l.b16 %v948
        %v1609 = vunpack.c.h.b16 %v948
        %v1610 = vunpack.c.l.b16 %v949
        %v1611 = vunpack.c.h.b16 %v949
        %v1612 = vunpack.c.l.b16 %v950
        %v1613 = vunpack.c.h.b16 %v950
        %v1614 = vunpack.c.l.b16 %v951
        %v1615 = vunpack.c.h.b16 %v951
        %v1616 = vunpack.c.l.b16 %v952
        %v1617 = vunpack.c.h.b16 %v952
        %v1618 = vunpack.c.l.b16 %v953
        %v1619 = vunpack.c.h.b16 %v953
        %v1620 = vunpack.c.l.b16 %v954
        %v1621 = vunpack.c.h.b16 %v954
        %v1622 = vunpack.c.l.b16 %v955
        %v1623 = vunpack.c.h.b16 %v955
        %v1624 = vunpack.c.l.b16 %v956
        %v1625 = vunpack.c.h.b16 %v956
        %v1626 = vunpack.c.l.b16 %v957
        %v1627 = vunpack.c.h.b16 %v957
        %v1628 = vunpack.c.l.b16 %v958
        %v1629 = vunpack.c.h.b16 %v958
        %v1630 = vunpack.c.l.b16 %v959
        %v1631 = vunpack.c.h.b16 %v959
        %v1632 = vunpack.c.l.b16 %v960
        %v1633 = vunpack.c.h.b16 %v960
        %v1634 = vunpack.c.l.b16 %v961
        %v1635 = vunpack.c.h.b16 %v961
        %v1636 = vunpack.c.l.b16 %v962
        %v1637 = vunpack.c.h.b16 %v962
        %v1638 = vunpack.c.l.b16 %v963
        %v1639 = vunpack.c.h.b16 %v963
        %v1640 = vunpack.c.l.b16 %v964
        %v1641 = vunpack.c.h.b16 %v964
        %v1642 = vunpack.c.l.b16 %v965
        %v1643 = vunpack.c.h.b16 %v965
        %v1644 = vunpack.c.l.b16 %v966
        %v1645 = vunpack.c.h.b16 %v966
        %v1646 = vunpack.c.l.b16 %v967
        %v1647 = vunpack.c.h.b16 %v967
        %v1648 = vunpack.c.l.b16 %v968
        %v1649 = vunpack.c.h.b16 %v968
        %v1650 = vunpack.c.l.b16 %v969
        %v1651 = vunpack.c.h.b16 %v969
        %v1652 = vunpack.c.l.b16 %v970
        %v1653 = vunpack.c.h.b16 %v970
        %v1654 = vunpack.c.l.b16 %v971
        %v1655 = vunpack.c.h.b16 %v971
        %v1656 = vunpack.c.l.b16 %v972
        %v1657 = vunpack.c.h.b16 %v972
        %v1658 = vunpack.c.l.b16 %v973
        %v1659 = vunpack.c.h.b16 %v973
        %v1660 = vunpack.c.l.b16 %v974
        %v1661 = vunpack.c.h.b16 %v974
        %v1662 = vunpack.c.l.b16 %v975
        %v1663 = vunpack.c.h.b16 %v975
        %v1664 = vunpack.c.l.b16 %v976
        %v1665 = vunpack.c.h.b16 %v976
        %v1666 = vunpack.c.l.b16 %v977
        %v1667 = vunpack.c.h.b16 %v977
        %v1668 = vunpack.c.l.b16 %v978
        %v1669 = vunpack.c.h.b16 %v978
        %v1670 = vunpack.c.l.b16 %v979
        %v1671 = vunpack.c.h.b16 %v979
        %v1672 = vunpack.c.l.b16 %v980
        %v1673 = vunpack.c.h.b16 %v980
        %v1674 = vunpack.c.l.b16 %v981
        %v1675 = vunpack.c.h.b16 %v981
        %v1676 = vunpack.c.l.b16 %v982
        %v1677 = vunpack.c.h.b16 %v982
        %v1678 = vunpack.c.l.b16 %v983
        %v1679 = vunpack.c.h.b16 %v983
        %v1680 = vunpack.c.l.b16 %v984
        %v1681 = vunpack.c.h.b16 %v984
        %v1682 = vunpack.c.l.b16 %v985
        %v1683 = vunpack.c.h.b16 %v985
        %v1684 = vunpack.c.l.b16 %v986
        %v1685 = vunpack.c.h.b16 %v986
        %v1686 = vunpack.c.l.b16 %v987
        %v1687 = vunpack.c.h.b16 %v987
        %v1688 = vunpack.c.l.b16 %v988
        %v1689 = vunpack.c.h.b16 %v988
        %v1690 = vunpack.c.l.b16 %v989
        %v1691 = vunpack.c.h.b16 %v989
        %v1692 = vunpack.c.l.b16 %v990
        %v1693 = vunpack.c.h.b16 %v990
        %v1694 = vunpack.c.l.b16 %v991
        %v1695 = vunpack.c.h.b16 %v991
        %v1696 = vunpack.c.l.b16 %v992
        %v1697 = vunpack.c.h.b16 %v992
        %v1698 = vunpack.c.l.b16 %v993
        %v1699 = vunpack.c.h.b16 %v993
        %v1700 = vunpack.c.l.b16 %v994
        %v1701 = vunpack.c.h.b16 %v994
        %v1702 = vunpack.c.l.b16 %v995
        %v1703 = vunpack.c.h.b16 %v995
        %v1704 = vunpack.c.l.b16 %v996
        %v1705 = vunpack.c.h.b16 %v996
        %v1706 = vunpack.c.l.b16 %v997
        %v1707 = vunpack.c.h.b16 %v997
        %v1708 = vunpack.c.l.b16 %v998
        %v1709 = vunpack.c.h.b16 %v998
        %v1710 = vunpack.c.l.b16 %v999
        %v1711 = vunpack.c.h.b16 %v999
        %v1712 = vunpack.c.l.b16 %v1000
        %v1713 = vunpack.c.h.b16 %v1000
        %v1714 = vunpack.c.l.b16 %v1001
        %v1715 = vunpack.c.h.b16 %v1001
        %v1716 = vunpack.c.l.b16 %v1002
        %v1717 = vunpack.c.h.b16 %v1002
        %v1718 = vunpack.c.l.b16 %v1003
        %v1719 = vunpack.c.h.b16 %v1003
        %v1720 = vunpack.c.l.b16 %v1004
        %v1721 = vunpack.c.h.b16 %v1004
        %v1722 = vunpack.c.l.b16 %v1005
        %v1723 = vunpack.c.h.b16 %v1005
        %v1724 = vunpack.c.l.b16 %v1006
        %v1725 = vunpack.c.h.b16 %v1006
        %v1726 = vunpack.c.l.b16 %v1007
        %v1727 = vunpack.c.h.b16 %v1007
        %v1728 = vunpack.c.l.b16 %v1008
        %v1729 = vunpack.c.h.b16 %v1008
        %v1730 = vunpack.c.l.b16 %v1009
        %v1731 = vunpack.c.h.b16 %v1009
        %v1732 = vunpack.c.l.b16 %v1010
        %v1733 = vunpack.c.h.b16 %v1010
        %v1734 = vunpack.c.l.b16 %v1011
        %v1735 = vunpack.c.h.b16 %v1011
        %v1736 = vunpack.c.l.b16 %v1012
        %v1737 = vunpack.c.h.b16 %v1012
        %v1738 = vunpack.c.l.b16 %v1013
        %v1739 = vunpack.c.h.b16 %v1013
        %v1740 = vunpack.c.l.b16 %v1014
        %v1741 = vunpack.c.h.b16 %v1014
        %v1742 = vunpack.c.l.b16 %v1015
        %v1743 = vunpack.c.h.b16 %v1015
        %v1744 = vunpack.c.l.b16 %v1016
        %v1745 = vunpack.c.h.b16 %v1016
        %v1746 = vunpack.c.l.b16 %v1017
        %v1747 = vunpack.c.h.b16 %v1017
        %v1748 = vunpack.c.l.b16 %v1018
        %v1749 = vunpack.c.h.b16 %v1018
        %v1750 = vunpack.c.l.b16 %v1019
        %v1751 = vunpack.c.h.b16 %v1019
        %v1752 = vunpack.c.l.b16 %v1020
        %v1753 = vunpack.c.h.b16 %v1020
        %v1754 = vunpack.c.l.b16 %v1021
        %v1755 = vunpack.c.h.b16 %v1021
        %v1756 = vunpack.c.l.b16 %v1022
        %v1757 = vunpack.c.h.b16 %v1022
        %v1758 = vunpack.c.l.b16 %v1023
        %v1759 = vunpack.c.h.b16 %v1023
        %v1760 = vunpack.c.l.b16 %v1024
        %v1761 = vunpack.c.h.b16 %v1024
        %v1762 = vunpack.c.l.b16 %v1025
        %v1763 = vunpack.c.h.b16 %v1025
        %v1764 = vunpack.c.l.b16 %v1026
        %v1765 = vunpack.c.h.b16 %v1026
        %v1766 = vunpack.c.l.b16 %v1027
        %v1767 = vunpack.c.h.b16 %v1027
        %v1768 = vunpack.c.l.b16 %v1028
        %v1769 = vunpack.c.h.b16 %v1028
        %v1770 = vunpack.c.l.b16 %v1029
        %v1771 = vunpack.c.h.b16 %v1029
        %v1772 = vunpack.c.l.b16 %v1030
        %v1773 = vunpack.c.h.b16 %v1030
        %v1774 = vunpack.c.l.b16 %v1031
        %v1775 = vunpack.c.h.b16 %v1031
        %v1776 = vunpack.c.l.b16 %v1032
        %v1777 = vunpack.c.h.b16 %v1032
        %v1778 = vunpack.c.l.b16 %v1033
        %v1779 = vunpack.c.h.b16 %v1033
        %v1780 = vunpack.c.l.b16 %v1034
        %v1781 = vunpack.c.h.b16 %v1034
        %v1782 = vunpack.c.l.b16 %v1035
        %v1783 = vunpack.c.h.b16 %v1035
        %v1784 = vunpack.c.l.b16 %v1036
        %v1785 = vunpack.c.h.b16 %v1036
        %v1786 = vunpack.c.l.b16 %v1037
        %v1787 = vunpack.c.h.b16 %v1037
        %v1788 = vunpack.c.l.b16 %v1038
        %v1789 = vunpack.c.h.b16 %v1038
        %v1790 = vunpack.c.l.b16 %v1039
        %v1791 = vunpack.c.h.b16 %v1039
        %v1792 = vunpack.c.l.b16 %v1040
        %v1793 = vunpack.c.h.b16 %v1040
        %v1794 = vunpack.c.l.b16 %v1041
        %v1795 = vunpack.c.h.b16 %v1041
        %v1796 = vunpack.c.l.b16 %v1042
        %v1797 = vunpack.c.h.b16 %v1042
        %v1798 = vunpack.c.l.b16 %v1043
        %v1799 = vunpack.c.h.b16 %v1043
        %v1800 = vunpack.c.l.b16 %v1044
        %v1801 = vunpack.c.h.b16 %v1044
        %v1802 = vunpack.c.l.b16 %v1045
        %v1803 = vunpack.c.h.b16 %v1045
        %v1804 = vunpack.c.l.b16 %v1046
        %v1805 = vunpack.c.h.b16 %v1046
        %v1806 = vunpack.c.l.b16 %v1047
        %v1807 = vunpack.c.h.b16 %v1047
        %v1808 = vunpack.c.l.b16 %v1048
        %v1809 = vunpack.c.h.b16 %v1048
        %v1810 = vunpack.c.l.b16 %v1049
        %v1811 = vunpack.c.h.b16 %v1049
        %v1812 = vunpack.c.l.b16 %v1050
        %v1813 = vunpack.c.h.b16 %v1050
        %v1814 = vunpack.c.l.b16 %v1051
        %v1815 = vunpack.c.h.b16 %v1051
        %v1816 = vunpack.c.l.b16 %v1052
        %v1817 = vunpack.c.h.b16 %v1052
        %v1818 = vunpack.c.l.b16 %v1053
        %v1819 = vunpack.c.h.b16 %v1053
        %v1820 = vunpack.c.l.b16 %v1054
        %v1821 = vunpack.c.h.b16 %v1054
        %v1822 = vunpack.c.l.b16 %v1055
        %v1823 = vunpack.c.h.b16 %v1055
        %v1824 = vunpack.c.l.b16 %v1056
        %v1825 = vunpack.c.h.b16 %v1056
        %v1826 = vpack.c.b16 %v1322, %v1314
        %v1827 = vpack.c.b16 %v1323, %v1315
        %v1828 = vpack.c.b16 %v1324, %v1316
        %v1829 = vpack.c.b16 %v1325, %v1317
        %v1830 = vpack.c.b16 %v1326, %v1318
        %v1831 = vpack.c.b16 %v1327, %v1319
        %v1832 = vpack.c.b16 %v1328, %v1320
        %v1833 = vpack.c.b16 %v1329, %v1321
        %v1834 = vpack.c.b16 %v1338, %v1330
        %v1835 = vpack.c.b16 %v1339, %v1331
        %v1836 = vpack.c.b16 %v1340, %v1332
        %v1837 = vpack.c.b16 %v1341, %v1333
        %v1838 = vpack.c.b16 %v1342, %v1334
        %v1839 = vpack.c.b16 %v1343, %v1335
        %v1840 = vpack.c.b16 %v1344, %v1336
        %v1841 = vpack.c.b16 %v1345, %v1337
        %v1842 = vpack.c.b16 %v1354, %v1346
        %v1843 = vpack.c.b16 %v1355, %v1347
        %v1844 = vpack.c.b16 %v1356, %v1348
        %v1845 = vpack.c.b16 %v1357, %v1349
        %v1846 = vpack.c.b16 %v1358, %v1350
        %v1847 = vpack.c.b16 %v1359, %v1351
        %v1848 = vpack.c.b16 %v1360, %v1352
        %v1849 = vpack.c.b16 %v1361, %v1353
        %v1850 = vpack.c.b16 %v1370, %v1362
        %v1851 = vpack.c.b16 %v1371, %v1363
        %v1852 = vpack.c.b16 %v1372, %v1364
        %v1853 = vpack.c.b16 %v1373, %v1365
        %v1854 = vpack.c.b16 %v1374, %v1366
        %v1855 = vpack.c.b16 %v1375, %v1367
        %v1856 = vpack.c.b16 %v1376, %v1368
        %v1857 = vpack.c.b16 %v1377, %v1369
        %v1858 = vpack.c.b16 %v1386, %v1378
        %v1859 = vpack.c.b16 %v1387, %v1379
        %v1860 = vpack.c.b16 %v1388, %v1380
        %v1861 = vpack.c.b16 %v1389, %v1381
        %v1862 = vpack.c.b16 %v1390, %v1382
        %v1863 = vpack.c.b16 %v1391, %v1383
        %v1864 = vpack.c.b16 %v1392, %v1384
        %v1865 = vpack.c.b16 %v1393, %v1385
        %v1866 = vpack.c.b16 %v1402, %v1394
        %v1867 = vpack.c.b16 %v1403, %v1395
        %v1868 = vpack.c.b16 %v1404, %v1396
        %v1869 = vpack.c.b16 %v1405, %v1397
        %v1870 = vpack.c.b16 %v1406, %v1398
        %v1871 = vpack.c.b16 %v1407, %v1399
        %v1872 = vpack.c.b16 %v1408, %v1400
        %v1873 = vpack.c.b16 %v1409, %v1401
        %v1874 = vpack.c.b16 %v1418, %v1410
        %v1875 = vpack.c.b16 %v1419, %v1411
        %v1876 = vpack.c.b16 %v1420, %v1412
        %v1877 = vpack.c.b16 %v1421, %v1413
        %v1878 = vpack.c.b16 %v1422, %v1414
        %v1879 = vpack.c.b16 %v1423, %v1415
        %v1880 = vpack.c.b16 %v1424, %v1416
        %v1881 = vpack.c.b16 %v1425, %v1417
        %v1882 = vpack.c.b16 %v1434, %v1426
        %v1883 = vpack.c.b16 %v1435, %v1427
        %v1884 = vpack.c.b16 %v1436, %v1428
        %v1885 = vpack.c.b16 %v1437, %v1429
        %v1886 = vpack.c.b16 %v1438, %v1430
        %v1887 = vpack.c.b16 %v1439, %v1431
        %v1888 = vpack.c.b16 %v1440, %v1432
        %v1889 = vpack.c.b16 %v1441, %v1433
        %v1890 = vpack.c.b16 %v1450, %v1442
        %v1891 = vpack.c.b16 %v1451, %v1443
        %v1892 = vpack.c.b16 %v1452, %v1444
        %v1893 = vpack.c.b16 %v1453, %v1445
        %v1894 = vpack.c.b16 %v1454, %v1446
        %v1895 = vpack.c.b16 %v1455, %v1447
        %v1896 = vpack.c.b16 %v1456, %v1448
        %v1897 = vpack.c.b16 %v1457, %v1449
        %v1898 = vpack.c.b16 %v1466, %v1458
        %v1899 = vpack.c.b16 %v1467, %v1459
        %v1900 = vpack.c.b16 %v1468, %v1460
        %v1901 = vpack.c.b16 %v1469, %v1461
        %v1902 = vpack.c.b16 %v1470, %v1462
        %v1903 = vpack.c.b16 %v1471, %v1463
        %v1904 = vpack.c.b16 %v1472, %v1464
        %v1905 = vpack.c.b16 %v1473, %v1465
        %v1906 = vpack.c.b16 %v1482, %v1474
        %v1907 = vpack.c.b16 %v1483, %v1475
        %v1908 = vpack.c.b16 %v1484, %v1476
        %v1909 = vpack.c.b16 %v1485, %v1477
        %v1910 = vpack.c.b16 %v1486, %v1478
        %v1911 = vpack.c.b16 %v1487, %v1479
        %v1912 = vpack.c.b16 %v1488, %v1480
        %v1913 = vpack.c.b16 %v1489, %v1481
        %v1914 = vpack.c.b16 %v1498, %v1490
        %v1915 = vpack.c.b16 %v1499, %v1491
        %v1916 = vpack.c.b16 %v1500, %v1492
        %v1917 = vpack.c.b16 %v1501, %v1493
        %v1918 = vpack.c.b16 %v1502, %v1494
        %v1919 = vpack.c.b16 %v1503, %v1495
        %v1920 = vpack.c.b16 %v1504, %v1496
        %v1921 = vpack.c.b16 %v1505, %v1497
        %v1922 = vpack.c.b16 %v1514, %v1506
        %v1923 = vpack.c.b16 %v1515, %v1507
        %v1924 = vpack.c.b16 %v1516, %v1508
        %v1925 = vpack.c.b16 %v1517, %v1509
        %v1926 = vpack.c.b16 %v1518, %v1510
        %v1927 = vpack.c.b16 %v1519, %v1511
        %v1928 = vpack.c.b16 %v1520, %v1512
        %v1929 = vpack.c.b16 %v1521, %v1513
        %v1930 = vpack.c.b16 %v1530, %v1522
        %v1931 = vpack.c.b16 %v1531, %v1523
        %v1932 = vpack.c.b16 %v1532, %v1524
        %v1933 = vpack.c.b16 %v1533, %v1525
        %v1934 = vpack.c.b16 %v1534, %v1526
        %v1935 = vpack.c.b16 %v1535, %v1527
        %v1936 = vpack.c.b16 %v1536, %v1528
        %v1937 = vpack.c.b16 %v1537, %v1529
        %v1938 = vpack.c.b16 %v1546, %v1538
        %v1939 = vpack.c.b16 %v1547, %v1539
        %v1940 = vpack.c.b16 %v1548, %v1540
        %v1941 = vpack.c.b16 %v1549, %v1541
        %v1942 = vpack.c.b16 %v1550, %v1542
        %v1943 = vpack.c.b16 %v1551, %v1543
        %v1944 = vpack.c.b16 %v1552, %v1544
        %v1945 = vpack.c.b16 %v1553, %v1545
        %v1946 = vpack.c.b16 %v1562, %v1554
        %v1947 = vpack.c.b16 %v1563, %v1555
        %v1948 = vpack.c.b16 %v1564, %v1556
        %v1949 = vpack.c.b16 %v1565, %v1557
        %v1950 = vpack.c.b16 %v1566, %v1558
        %v1951 = vpack.c.b16 %v1567, %v1559
        %v1952 = vpack.c.b16 %v1568, %v1560
        %v1953 = vpack.c.b16 %v1569, %v1561
        %v1954 = vpack.c.b16 %v1578, %v1570
        %v1955 = vpack.c.b16 %v1579, %v1571
        %v1956 = vpack.c.b16 %v1580, %v1572
        %v1957 = vpack.c.b16 %v1581, %v1573
        %v1958 = vpack.c.b16 %v1582, %v1574
        %v1959 = vpack.c.b16 %v1583, %v1575
        %v1960 = vpack.c.b16 %v1584, %v1576
        %v1961 = vpack.c.b16 %v1585, %v1577
        %v1962 = vpack.c.b16 %v1594, %v1586
        %v1963 = vpack.c.b16 %v1595, %v1587
        %v1964 = vpack.c.b16 %v1596, %v1588
        %v1965 = vpack.c.b16 %v1597, %v1589
        %v1966 = vpack.c.b16 %v1598, %v1590
        %v1967 = vpack.c.b16 %v1599, %v1591
        %v1968 = vpack.c.b16 %v1600, %v1592
        %v1969 = vpack.c.b16 %v1601, %v1593
        %v1970 = vpack.c.b16 %v1610, %v1602
        %v1971 = vpack.c.b16 %v1611, %v1603
        %v1972 = vpack.c.b16 %v1612, %v1604
        %v1973 = vpack.c.b16 %v1613, %v1605
        %v1974 = vpack.c.b16 %v1614, %v1606
        %v1975 = vpack.c.b16 %v1615, %v1607
        %v1976 = vpack.c.b16 %v1616, %v1608
        %v1977 = vpack.c.b16 %v1617, %v1609
        %v1978 = vpack.c.b16 %v1626, %v1618
        %v1979 = vpack.c.b16 %v1627, %v1619
        %v1980 = vpack.c.b16 %v1628, %v1620
        %v1981 = vpack.c.b16 %v1629, %v1621
        %v1982 = vpack.c.b16 %v1630, %v1622
        %v1983 = vpack.c.b16 %v1631, %v1623
        %v1984 = vpack.c.b16 %v1632, %v1624
        %v1985 = vpack.c.b16 %v1633, %v1625
        %v1986 = vpack.c.b16 %v1642, %v1634
        %v1987 = vpack.c.b16 %v1643, %v1635
        %v1988 = vpack.c.b16 %v1644, %v1636
        %v1989 = vpack.c.b16 %v1645, %v1637
        %v1990 = vpack.c.b16 %v1646, %v1638
        %v1991 = vpack.c.b16 %v1647, %v1639
        %v1992 = vpack.c.b16 %v1648, %v1640
        %v1993 = vpack.c.b16 %v1649, %v1641
        %v1994 = vpack.c.b16 %v1658, %v1650
        %v1995 = vpack.c.b16 %v1659, %v1651
        %v1996 = vpack.c.b16 %v1660, %v1652
        %v1997 = vpack.c.b16 %v1661, %v1653
        %v1998 = vpack.c.b16 %v1662, %v1654
        %v1999 = vpack.c.b16 %v1663, %v1655
        %v2000 = vpack.c.b16 %v1664, %v1656
        %v2001 = vpack.c.b16 %v1665, %v1657
        %v2002 = vpack.c.b16 %v1674, %v1666
        %v2003 = vpack.c.b16 %v1675, %v1667
        %v2004 = vpack.c.b16 %v1676, %v1668
        %v2005 = vpack.c.b16 %v1677, %v1669
        %v2006 = vpack.c.b16 %v1678, %v1670
        %v2007 = vpack.c.b16 %v1679, %v1671
        %v2008 = vpack.c.b16 %v1680, %v1672
        %v2009 = vpack.c.b16 %v1681, %v1673
        %v2010 = vpack.c.b16 %v1690, %v1682
        %v2011 = vpack.c.b16 %v1691, %v1683
        %v2012 = vpack.c.b16 %v1692, %v1684
        %v2013 = vpack.c.b16 %v1693, %v1685
        %v2014 = vpack.c.b16 %v1694, %v1686
        %v2015 = vpack.c.b16 %v1695, %v1687
        %v2016 = vpack.c.b16 %v1696, %v1688
        %v2017 = vpack.c.b16 %v1697, %v1689
        %v2018 = vpack.c.b16 %v1706, %v1698
        %v2019 = vpack.c.b16 %v1707, %v1699
        %v2020 = vpack.c.b16 %v1708, %v1700
        %v2021 = vpack.c.b16 %v1709, %v1701
        %v2022 = vpack.c.b16 %v1710, %v1702
        %v2023 = vpack.c.b16 %v1711, %v1703
        %v2024 = vpack.c.b16 %v1712, %v1704
        %v2025 = vpack.c.b16 %v1713, %v1705
        %v2026 = vpack.c.b16 %v1722, %v1714
        %v2027 = vpack.c.b16 %v1723, %v1715
        %v2028 = vpack.c.b16 %v1724, %v1716
        %v2029 = vpack.c.b16 %v1725, %v1717
        %v2030 = vpack.c.b16 %v1726, %v1718
        %v2031 = vpack.c.b16 %v1727, %v1719
        %v2032 = vpack.c.b16 %v1728, %v1720
        %v2033 = vpack.c.b16 %v1729, %v1721
        %v2034 = vpack.c.b16 %v1738, %v1730
        %v2035 = vpack.c.b16 %v1739, %v1731
        %v2036 = vpack.c.b16 %v1740, %v1732
        %v2037 = vpack.c.b16 %v1741, %v1733
        %v2038 = vpack.c.b16 %v1742, %v1734
        %v2039 = vpack.c.b16 %v1743, %v1735
        %v2040 = vpack.c.b16 %v1744, %v1736
        %v2041 = vpack.c.b16 %v1745, %v1737
        %v2042 = vpack.c.b16 %v1754, %v1746
        %v2043 = vpack.c.b16 %v1755, %v1747
        %v2044 = vpack.c.b16 %v1756, %v1748
        %v2045 = vpack.c.b16 %v1757, %v1749
        %v2046 = vpack.c.b16 %v1758, %v1750
        %v2047 = vpack.c.b16 %v1759, %v1751
        %v2048 = vpack.c.b16 %v1760, %v1752
        %v2049 = vpack.c.b16 %v1761, %v1753
        %v2050 = vpack.c.b16 %v1770, %v1762
        %v2051 = vpack.c.b16 %v1771, %v1763
        %v2052 = vpack.c.b16 %v1772, %v1764
        %v2053 = vpack.c.b16 %v1773, %v1765
        %v2054 = vpack.c.b16 %v1774, %v1766
        %v2055 = vpack.c.b16 %v1775, %v1767
        %v2056 = vpack.c.b16 %v1776, %v1768
        %v2057 = vpack.c.b16 %v1777, %v1769
        %v2058 = vpack.c.b16 %v1786, %v1778
        %v2059 = vpack.c.b16 %v1787, %v1779
        %v2060 = vpack.c.b16 %v1788, %v1780
        %v2061 = vpack.c.b16 %v1789, %v1781
        %v2062 = vpack.c.b16 %v1790, %v1782
        %v2063 = vpack.c.b16 %v1791, %v1783
        %v2064 = vpack.c.b16 %v1792, %v1784
        %v2065 = vpack.c.b16 %v1793, %v1785
        %v2066 = vpack.c.b16 %v1802, %v1794
        %v2067 = vpack.c.b16 %v1803, %v1795
        %v2068 = vpack.c.b16 %v1804, %v1796
        %v2069 = vpack.c.b16 %v1805, %v1797
        %v2070 = vpack.c.b16 %v1806, %v1798
        %v2071 = vpack.c.b16 %v1807, %v1799
        %v2072 = vpack.c.b16 %v1808, %v1800
        %v2073 = vpack.c.b16 %v1809, %v1801
        %v2074 = vpack.c.b16 %v1818, %v1810
        %v2075 = vpack.c.b16 %v1819, %v1811
        %v2076 = vpack.c.b16 %v1820, %v1812
        %v2077 = vpack.c.b16 %v1821, %v1813
        %v2078 = vpack.c.b16 %v1822, %v1814
        %v2079 = vpack.c.b16 %v1823, %v1815
        %v2080 = vpack.c.b16 %v1824, %v1816
        %v2081 = vpack.c.b16 %v1825, %v1817
        %v2339 = vlaneseq
        %v2340 = vshrl.u32 %v2339, 7
        %v2341 = vsub.s32 0, %v2340
        %v2342 = vrot.slane %v1057, %v2341
        %v2343 = vlaneseq
        %v2344 = vshrl.u32 %v2343, 7
        %v2345 = vsub.s32 1, %v2344
        %v2346 = vrot.slane %v1057, %v2345
        %v2347 = vlaneseq
        %v2348 = vshrl.u32 %v2347, 7
        %v2349 = vsub.s32 2, %v2348
        %v2350 = vrot.slane %v1057, %v2349
        %v2351 = vlaneseq
        %v2352 = vshrl.u32 %v2351, 7
        %v2353 = vsub.s32 3, %v2352
        %v2354 = vrot.slane %v1057, %v2353
        %v2355 = vlaneseq
        %v2356 = vshrl.u32 %v2355, 7
        %v2357 = vsub.s32 4, %v2356
        %v2358 = vrot.slane %v1057, %v2357
        %v2359 = vlaneseq
        %v2360 = vshrl.u32 %v2359, 7
        %v2361 = vsub.s32 5, %v2360
        %v2362 = vrot.slane %v1057, %v2361
        %v2363 = vlaneseq
        %v2364 = vshrl.u32 %v2363, 7
        %v2365 = vsub.s32 6, %v2364
        %v2366 = vrot.slane %v1057, %v2365
        %v2367 = vlaneseq
        %v2368 = vshrl.u32 %v2367, 7
        %v2369 = vsub.s32 7, %v2368
        %v2370 = vrot.slane %v1057, %v2369
        %2379 = vmatprep.subr.bf16.mxu0 %v1827
        %2380 = vmatpush1.bf16.msra.mxu0 %v1826
        %2381 = vmatprep.subr.bf16.mxu0 %v1835
        %2382 = vmatpush1.bf16.msra.mxu0 %v1834
        %2383 = vmatprep.subr.bf16.mxu0 %v1843
        %2384 = vmatpush1.bf16.msra.mxu0 %v1842
        %2385 = vmatprep.subr.bf16.mxu0 %v1851
        %2386 = vmatpush1.bf16.msra.mxu0 %v1850
        %2387 = vmatprep.subr.bf16.mxu0 %v1859
        %2388 = vmatpush1.bf16.msra.mxu0 %v1858
        %2389 = vmatprep.subr.bf16.mxu0 %v1867
        %2390 = vmatpush1.bf16.msra.mxu0 %v1866
        %2391 = vmatprep.subr.bf16.mxu0 %v1875
        %2392 = vmatpush1.bf16.msra.mxu0 %v1874
        %2393 = vmatprep.subr.bf16.mxu0 %v1883
        %2394 = vmatpush1.bf16.msra.mxu0 %v1882
        %2395 = vmatprep.subr.bf16.mxu0 %v1891
        %2396 = vmatpush1.bf16.msra.mxu0 %v1890
        %2397 = vmatprep.subr.bf16.mxu0 %v1899
        %2398 = vmatpush1.bf16.msra.mxu0 %v1898
        %2399 = vmatprep.subr.bf16.mxu0 %v1907
        %2400 = vmatpush1.bf16.msra.mxu0 %v1906
        %2401 = vmatprep.subr.bf16.mxu0 %v1915
        %2402 = vmatpush1.bf16.msra.mxu0 %v1914
        %2403 = vmatprep.subr.bf16.mxu0 %v1923
        %2404 = vmatpush1.bf16.msra.mxu0 %v1922
        %2405 = vmatprep.subr.bf16.mxu0 %v1931
        %2406 = vmatpush1.bf16.msra.mxu0 %v1930
        %2407 = vmatprep.subr.bf16.mxu0 %v1939
        %2408 = vmatpush1.bf16.msra.mxu0 %v1938
        %2409 = vmatprep.subr.bf16.mxu0 %v1947
        %2410 = vmatpush1.bf16.msra.mxu0 %v1946
        %2411 = vmatprep.mubr.bf16.mxu0 %v798
        %2412 = vmatmul.mubr.bf16.gmra.mrb[0].mxu0 %v797
        %v2413 = vpop.f32.mrb[0].mxu0
        %v2414 = vadd.f32 %v2342, %v2413
        %v2415 = vpop.f32.mrb[0].mxu0
        %v2416 = vadd.f32 %v2346, %v2415
        %v2417 = vpop.f32.mrb[0].mxu0
        %v2418 = vpop.f32.mrb[0].mxu0
        %2419 = vdwg.mxu0
        %2420 = vmatprep.subr.bf16.mxu0 %v1955
        %2421 = vmatpush1.bf16.msra.mxu0 %v1954
        %2422 = vmatprep.subr.bf16.mxu0 %v1963
        %2423 = vmatpush1.bf16.msra.mxu0 %v1962
        %2424 = vmatprep.subr.bf16.mxu0 %v1971
        %2425 = vmatpush1.bf16.msra.mxu0 %v1970
        %2426 = vmatprep.subr.bf16.mxu0 %v1979
        %2427 = vmatpush1.bf16.msra.mxu0 %v1978
        %2428 = vmatprep.subr.bf16.mxu0 %v1987
        %2429 = vmatpush1.bf16.msra.mxu0 %v1986
        %2430 = vmatprep.subr.bf16.mxu0 %v1995
        %2431 = vmatpush1.bf16.msra.mxu0 %v1994
        %2432 = vmatprep.subr.bf16.mxu0 %v2003
        %2433 = vmatpush1.bf16.msra.mxu0 %v2002
        %2434 = vmatprep.subr.bf16.mxu0 %v2011
        %2435 = vmatpush1.bf16.msra.mxu0 %v2010
        %2436 = vmatprep.subr.bf16.mxu0 %v2019
        %2437 = vmatpush1.bf16.msra.mxu0 %v2018
        %2438 = vmatprep.subr.bf16.mxu0 %v2027
        %2439 = vmatpush1.bf16.msra.mxu0 %v2026
        %2440 = vmatprep.subr.bf16.mxu0 %v2035
        %2441 = vmatpush1.bf16.msra.mxu0 %v2034
        %2442 = vmatprep.subr.bf16.mxu0 %v2043
        %2443 = vmatpush1.bf16.msra.mxu0 %v2042
        %2444 = vmatprep.subr.bf16.mxu0 %v2051
        %2445 = vmatpush1.bf16.msra.mxu0 %v2050
        %2446 = vmatprep.subr.bf16.mxu0 %v2059
        %2447 = vmatpush1.bf16.msra.mxu0 %v2058
        %2448 = vmatprep.subr.bf16.mxu0 %v2067
        %2449 = vmatpush1.bf16.msra.mxu0 %v2066
        %2450 = vmatprep.subr.bf16.mxu0 %v2075
        %2451 = vmatpush1.bf16.msra.mxu0 %v2074
        %2452 = vmatprep.mubr.bf16.mxu0 %v800
        %2453 = vmatmul.mubr.bf16.gmra.mrb[0].mxu0 %v799
        %v2454 = vpop.f32.mrb[0].mxu0
        %v2455 = vadd.f32 %v2414, %v2454
        %v2456 = vpop.f32.mrb[0].mxu0
        %v2457 = vadd.f32 %v2416, %v2456
        %v2458 = vpop.f32.mrb[0].mxu0
        %v2459 = vpop.f32.mrb[0].mxu0
        %2460 = vdwg.mxu0
        %2461 = vmatprep.subr.bf16.mxu0 %v1829
        %2462 = vmatpush1.bf16.msra.mxu0 %v1828
        %2463 = vmatprep.subr.bf16.mxu0 %v1837
        %2464 = vmatpush1.bf16.msra.mxu0 %v1836
        %2465 = vmatprep.subr.bf16.mxu0 %v1845
        %2466 = vmatpush1.bf16.msra.mxu0 %v1844
        %2467 = vmatprep.subr.bf16.mxu0 %v1853
        %2468 = vmatpush1.bf16.msra.mxu0 %v1852
        %2469 = vmatprep.subr.bf16.mxu0 %v1861
        %2470 = vmatpush1.bf16.msra.mxu0 %v1860
        %2471 = vmatprep.subr.bf16.mxu0 %v1869
        %2472 = vmatpush1.bf16.msra.mxu0 %v1868
        %2473 = vmatprep.subr.bf16.mxu0 %v1877
        %2474 = vmatpush1.bf16.msra.mxu0 %v1876
        %2475 = vmatprep.subr.bf16.mxu0 %v1885
        %2476 = vmatpush1.bf16.msra.mxu0 %v1884
        %2477 = vmatprep.subr.bf16.mxu0 %v1893
        %2478 = vmatpush1.bf16.msra.mxu0 %v1892
        %2479 = vmatprep.subr.bf16.mxu0 %v1901
        %2480 = vmatpush1.bf16.msra.mxu0 %v1900
        %2481 = vmatprep.subr.bf16.mxu0 %v1909
        %2482 = vmatpush1.bf16.msra.mxu0 %v1908
        %2483 = vmatprep.subr.bf16.mxu0 %v1917
        %2484 = vmatpush1.bf16.msra.mxu0 %v1916
        %2485 = vmatprep.subr.bf16.mxu0 %v1925
        %2486 = vmatpush1.bf16.msra.mxu0 %v1924
        %2487 = vmatprep.subr.bf16.mxu0 %v1933
        %2488 = vmatpush1.bf16.msra.mxu0 %v1932
        %2489 = vmatprep.subr.bf16.mxu0 %v1941
        %2490 = vmatpush1.bf16.msra.mxu0 %v1940
        %2491 = vmatprep.subr.bf16.mxu0 %v1949
        %2492 = vmatpush1.bf16.msra.mxu0 %v1948
        %2493 = vmatprep.mubr.bf16.mxu0 %v798
        %2494 = vmatmul.mubr.bf16.gmra.mrb[0].mxu0 %v797
        %v2495 = vpop.f32.mrb[0].mxu0
        %v2496 = vadd.f32 %v2350, %v2495
        %v2497 = vpop.f32.mrb[0].mxu0
        %v2498 = vadd.f32 %v2354, %v2497
        %v2499 = vpop.f32.mrb[0].mxu0
        %v2500 = vpop.f32.mrb[0].mxu0
        %2501 = vdwg.mxu0
        %2502 = vmatprep.subr.bf16.mxu0 %v1957
        %2503 = vmatpush1.bf16.msra.mxu0 %v1956
        %2504 = vmatprep.subr.bf16.mxu0 %v1965
        %2505 = vmatpush1.bf16.msra.mxu0 %v1964
        %2506 = vmatprep.subr.bf16.mxu0 %v1973
        %2507 = vmatpush1.bf16.msra.mxu0 %v1972
        %2508 = vmatprep.subr.bf16.mxu0 %v1981
        %2509 = vmatpush1.bf16.msra.mxu0 %v1980
        %2510 = vmatprep.subr.bf16.mxu0 %v1989
        %2511 = vmatpush1.bf16.msra.mxu0 %v1988
        %2512 = vmatprep.subr.bf16.mxu0 %v1997
        %2513 = vmatpush1.bf16.msra.mxu0 %v1996
        %2514 = vmatprep.subr.bf16.mxu0 %v2005
        %2515 = vmatpush1.bf16.msra.mxu0 %v2004
        %2516 = vmatprep.subr.bf16.mxu0 %v2013
        %2517 = vmatpush1.bf16.msra.mxu0 %v2012
        %2518 = vmatprep.subr.bf16.mxu0 %v2021
        %2519 = vmatpush1.bf16.msra.mxu0 %v2020
        %2520 = vmatprep.subr.bf16.mxu0 %v2029
        %2521 = vmatpush1.bf16.msra.mxu0 %v2028
        %2522 = vmatprep.subr.bf16.mxu0 %v2037
        %2523 = vmatpush1.bf16.msra.mxu0 %v2036
        %2524 = vmatprep.subr.bf16.mxu0 %v2045
        %2525 = vmatpush1.bf16.msra.mxu0 %v2044
        %2526 = vmatprep.subr.bf16.mxu0 %v2053
        %2527 = vmatpush1.bf16.msra.mxu0 %v2052
        %2528 = vmatprep.subr.bf16.mxu0 %v2061
        %2529 = vmatpush1.bf16.msra.mxu0 %v2060
        %2530 = vmatprep.subr.bf16.mxu0 %v2069
        %2531 = vmatpush1.bf16.msra.mxu0 %v2068
        %2532 = vmatprep.subr.bf16.mxu0 %v2077
        %2533 = vmatpush1.bf16.msra.mxu0 %v2076
        %2534 = vmatprep.mubr.bf16.mxu0 %v800
        %2535 = vmatmul.mubr.bf16.gmra.mrb[0].mxu0 %v799
        %v2536 = vpop.f32.mrb[0].mxu0
        %v2537 = vadd.f32 %v2496, %v2536
        %v2538 = vpop.f32.mrb[0].mxu0
        %v2539 = vadd.f32 %v2498, %v2538
        %v2540 = vpop.f32.mrb[0].mxu0
        %v2541 = vpop.f32.mrb[0].mxu0
        %2542 = vdwg.mxu0
        %2543 = vmatprep.subr.bf16.mxu0 %v1831
        %2544 = vmatpush1.bf16.msra.mxu0 %v1830
        %2545 = vmatprep.subr.bf16.mxu0 %v1839
        %2546 = vmatpush1.bf16.msra.mxu0 %v1838
        %2547 = vmatprep.subr.bf16.mxu0 %v1847
        %2548 = vmatpush1.bf16.msra.mxu0 %v1846
        %2549 = vmatprep.subr.bf16.mxu0 %v1855
        %2550 = vmatpush1.bf16.msra.mxu0 %v1854
        %2551 = vmatprep.subr.bf16.mxu0 %v1863
        %2552 = vmatpush1.bf16.msra.mxu0 %v1862
        %2553 = vmatprep.subr.bf16.mxu0 %v1871
        %2554 = vmatpush1.bf16.msra.mxu0 %v1870
        %2555 = vmatprep.subr.bf16.mxu0 %v1879
        %2556 = vmatpush1.bf16.msra.mxu0 %v1878
        %2557 = vmatprep.subr.bf16.mxu0 %v1887
        %2558 = vmatpush1.bf16.msra.mxu0 %v1886
        %2559 = vmatprep.subr.bf16.mxu0 %v1895
        %2560 = vmatpush1.bf16.msra.mxu0 %v1894
        %2561 = vmatprep.subr.bf16.mxu0 %v1903
        %2562 = vmatpush1.bf16.msra.mxu0 %v1902
        %2563 = vmatprep.subr.bf16.mxu0 %v1911
        %2564 = vmatpush1.bf16.msra.mxu0 %v1910
        %2565 = vmatprep.subr.bf16.mxu0 %v1919
        %2566 = vmatpush1.bf16.msra.mxu0 %v1918
        %2567 = vmatprep.subr.bf16.mxu0 %v1927
        %2568 = vmatpush1.bf16.msra.mxu0 %v1926
        %2569 = vmatprep.subr.bf16.mxu0 %v1935
        %2570 = vmatpush1.bf16.msra.mxu0 %v1934
        %2571 = vmatprep.subr.bf16.mxu0 %v1943
        %2572 = vmatpush1.bf16.msra.mxu0 %v1942
        %2573 = vmatprep.subr.bf16.mxu0 %v1951
        %2574 = vmatpush1.bf16.msra.mxu0 %v1950
        %2575 = vmatprep.mubr.bf16.mxu0 %v798
        %2576 = vmatmul.mubr.bf16.gmra.mrb[0].mxu0 %v797
        %v2577 = vpop.f32.mrb[0].mxu0
        %v2578 = vadd.f32 %v2358, %v2577
        %v2579 = vpop.f32.mrb[0].mxu0
        %v2580 = vadd.f32 %v2362, %v2579
        %v2581 = vpop.f32.mrb[0].mxu0
        %v2582 = vpop.f32.mrb[0].mxu0
        %2583 = vdwg.mxu0
        %2584 = vmatprep.subr.bf16.mxu0 %v1959
        %2585 = vmatpush1.bf16.msra.mxu0 %v1958
        %2586 = vmatprep.subr.bf16.mxu0 %v1967
        %2587 = vmatpush1.bf16.msra.mxu0 %v1966
        %2588 = vmatprep.subr.bf16.mxu0 %v1975
        %2589 = vmatpush1.bf16.msra.mxu0 %v1974
        %2590 = vmatprep.subr.bf16.mxu0 %v1983
        %2591 = vmatpush1.bf16.msra.mxu0 %v1982
        %2592 = vmatprep.subr.bf16.mxu0 %v1991
        %2593 = vmatpush1.bf16.msra.mxu0 %v1990
        %2594 = vmatprep.subr.bf16.mxu0 %v1999
        %2595 = vmatpush1.bf16.msra.mxu0 %v1998
        %2596 = vmatprep.subr.bf16.mxu0 %v2007
        %2597 = vmatpush1.bf16.msra.mxu0 %v2006
        %2598 = vmatprep.subr.bf16.mxu0 %v2015
        %2599 = vmatpush1.bf16.msra.mxu0 %v2014
        %2600 = vmatprep.subr.bf16.mxu0 %v2023
        %2601 = vmatpush1.bf16.msra.mxu0 %v2022
        %2602 = vmatprep.subr.bf16.mxu0 %v2031
        %2603 = vmatpush1.bf16.msra.mxu0 %v2030
        %2604 = vmatprep.subr.bf16.mxu0 %v2039
        %2605 = vmatpush1.bf16.msra.mxu0 %v2038
        %2606 = vmatprep.subr.bf16.mxu0 %v2047
        %2607 = vmatpush1.bf16.msra.mxu0 %v2046
        %2608 = vmatprep.subr.bf16.mxu0 %v2055
        %2609 = vmatpush1.bf16.msra.mxu0 %v2054
        %2610 = vmatprep.subr.bf16.mxu0 %v2063
        %2611 = vmatpush1.bf16.msra.mxu0 %v2062
        %2612 = vmatprep.subr.bf16.mxu0 %v2071
        %2613 = vmatpush1.bf16.msra.mxu0 %v2070
        %2614 = vmatprep.subr.bf16.mxu0 %v2079
        %2615 = vmatpush1.bf16.msra.mxu0 %v2078
        %2616 = vmatprep.mubr.bf16.mxu0 %v800
        %2617 = vmatmul.mubr.bf16.gmra.mrb[0].mxu0 %v799
        %v2618 = vpop.f32.mrb[0].mxu0
        %v2619 = vadd.f32 %v2578, %v2618
        %v2620 = vpop.f32.mrb[0].mxu0
        %v2621 = vadd.f32 %v2580, %v2620
        %v2622 = vpop.f32.mrb[0].mxu0
        %v2623 = vpop.f32.mrb[0].mxu0
        %2624 = vdwg.mxu0
        %2625 = vmatprep.subr.bf16.mxu0 %v1833
        %2626 = vmatpush1.bf16.msra.mxu0 %v1832
        %2627 = vmatprep.subr.bf16.mxu0 %v1841
        %2628 = vmatpush1.bf16.msra.mxu0 %v1840
        %2629 = vmatprep.subr.bf16.mxu0 %v1849
        %2630 = vmatpush1.bf16.msra.mxu0 %v1848
        %2631 = vmatprep.subr.bf16.mxu0 %v1857
        %2632 = vmatpush1.bf16.msra.mxu0 %v1856
        %2633 = vmatprep.subr.bf16.mxu0 %v1865
        %2634 = vmatpush1.bf16.msra.mxu0 %v1864
        %2635 = vmatprep.subr.bf16.mxu0 %v1873
        %2636 = vmatpush1.bf16.msra.mxu0 %v1872
        %2637 = vmatprep.subr.bf16.mxu0 %v1881
        %2638 = vmatpush1.bf16.msra.mxu0 %v1880
        %2639 = vmatprep.subr.bf16.mxu0 %v1889
        %2640 = vmatpush1.bf16.msra.mxu0 %v1888
        %2641 = vmatprep.subr.bf16.mxu0 %v1897
        %2642 = vmatpush1.bf16.msra.mxu0 %v1896
        %2643 = vmatprep.subr.bf16.mxu0 %v1905
        %2644 = vmatpush1.bf16.msra.mxu0 %v1904
        %2645 = vmatprep.subr.bf16.mxu0 %v1913
        %2646 = vmatpush1.bf16.msra.mxu0 %v1912
        %2647 = vmatprep.subr.bf16.mxu0 %v1921
        %2648 = vmatpush1.bf16.msra.mxu0 %v1920
        %2649 = vmatprep.subr.bf16.mxu0 %v1929
        %2650 = vmatpush1.bf16.msra.mxu0 %v1928
        %2651 = vmatprep.subr.bf16.mxu0 %v1937
        %2652 = vmatpush1.bf16.msra.mxu0 %v1936
        %2653 = vmatprep.subr.bf16.mxu0 %v1945
        %2654 = vmatpush1.bf16.msra.mxu0 %v1944
        %2655 = vmatprep.subr.bf16.mxu0 %v1953
        %2656 = vmatpush1.bf16.msra.mxu0 %v1952
        %2657 = vmatprep.mubr.bf16.mxu0 %v798
        %2658 = vmatmul.mubr.bf16.gmra.mrb[0].mxu0 %v797
        %v2659 = vpop.f32.mrb[0].mxu0
        %v2660 = vadd.f32 %v2366, %v2659
        %v2661 = vpop.f32.mrb[0].mxu0
        %v2662 = vadd.f32 %v2370, %v2661
        %v2663 = vpop.f32.mrb[0].mxu0
        %v2664 = vpop.f32.mrb[0].mxu0
        %2665 = vdwg.mxu0
        %2666 = vmatprep.subr.bf16.mxu0 %v1961
        %2667 = vmatpush1.bf16.msra.mxu0 %v1960
        %2668 = vmatprep.subr.bf16.mxu0 %v1969
        %2669 = vmatpush1.bf16.msra.mxu0 %v1968
        %2670 = vmatprep.subr.bf16.mxu0 %v1977
        %2671 = vmatpush1.bf16.msra.mxu0 %v1976
        %2672 = vmatprep.subr.bf16.mxu0 %v1985
        %2673 = vmatpush1.bf16.msra.mxu0 %v1984
        %2674 = vmatprep.subr.bf16.mxu0 %v1993
        %2675 = vmatpush1.bf16.msra.mxu0 %v1992
        %2676 = vmatprep.subr.bf16.mxu0 %v2001
        %2677 = vmatpush1.bf16.msra.mxu0 %v2000
        %2678 = vmatprep.subr.bf16.mxu0 %v2009
        %2679 = vmatpush1.bf16.msra.mxu0 %v2008
        %2680 = vmatprep.subr.bf16.mxu0 %v2017
        %2681 = vmatpush1.bf16.msra.mxu0 %v2016
        %2682 = vmatprep.subr.bf16.mxu0 %v2025
        %2683 = vmatpush1.bf16.msra.mxu0 %v2024
        %2684 = vmatprep.subr.bf16.mxu0 %v2033
        %2685 = vmatpush1.bf16.msra.mxu0 %v2032
        %2686 = vmatprep.subr.bf16.mxu0 %v2041
        %2687 = vmatpush1.bf16.msra.mxu0 %v2040
        %2688 = vmatprep.subr.bf16.mxu0 %v2049
        %2689 = vmatpush1.bf16.msra.mxu0 %v2048
        %2690 = vmatprep.subr.bf16.mxu0 %v2057
        %2691 = vmatpush1.bf16.msra.mxu0 %v2056
        %2692 = vmatprep.subr.bf16.mxu0 %v2065
        %2693 = vmatpush1.bf16.msra.mxu0 %v2064
        %2694 = vmatprep.subr.bf16.mxu0 %v2073
        %2695 = vmatpush1.bf16.msra.mxu0 %v2072
        %2696 = vmatprep.subr.bf16.mxu0 %v2081
        %2697 = vmatpush1.bf16.msra.mxu0 %v2080
        %2698 = vmatprep.mubr.bf16.mxu0 %v800
        %2699 = vmatmul.mubr.bf16.gmra.mrb[0].mxu0 %v799
        %v2700 = vpop.f32.mrb[0].mxu0
        %v2701 = vadd.f32 %v2660, %v2700
        %v2702 = vpop.f32.mrb[0].mxu0
        %v2703 = vadd.f32 %v2662, %v2702
        %v2704 = vpop.f32.mrb[0].mxu0
        %v2705 = vpop.f32.mrb[0].mxu0
        %2706 = vdwg.mxu0
        %v2707 = vmax.f32 %v2455, 0.0
        %v2708 = vmax.f32 %v2457, 0.0
        %v2709 = vmax.f32 %v2537, 0.0
        %v2710 = vmax.f32 %v2539, 0.0
        %v2711 = vmax.f32 %v2619, 0.0
        %v2712 = vmax.f32 %v2621, 0.0
        %v2713 = vmax.f32 %v2701, 0.0
        %v2714 = vmax.f32 %v2703, 0.0
        %v2715 = vpack.c.bf16 %v2707, %v2707
        %v2716 = vpack.c.bf16 %v2708, %v2708
        %v2717 = vpack.c.bf16 %v2709, %v2709
        %v2718 = vpack.c.bf16 %v2710, %v2710
        %v2719 = vpack.c.bf16 %v2711, %v2711
        %v2720 = vpack.c.bf16 %v2712, %v2712
        %v2721 = vpack.c.bf16 %v2713, %v2713
        %v2722 = vpack.c.bf16 %v2714, %v2714
        %v2723 = vld [vmem:[%s5] sm:$0xf]
        %v2724 = vld [vmem:[%s5 + $0x4] sm:$0xf]
        %v2725 = vld [vmem:[%s5 + $0x8] sm:$0xf]
        %v2726 = vld [vmem:[%s5 + $0xc] sm:$0xf]
        %v2727 = vld [vmem:[%s5 + $0x10] sm:$0xf]
        %v2728 = vld [vmem:[%s5 + $0x14] sm:$0xf]
        %v2729 = vld [vmem:[%s5 + $0x18] sm:$0xf]
        %v2730 = vld [vmem:[%s5 + $0x1c] sm:$0xf]
        %v2731 = vld [vmem:[%s5 + $0x20] sm:$0xf]
        %v2732 = vld [vmem:[%s5 + $0x24] sm:$0xf]
        %v2733 = vld [vmem:[%s5 + $0x28] sm:$0xf]
        %v2734 = vld [vmem:[%s5 + $0x2c] sm:$0xf]
        %v2735 = vld [vmem:[%s5 + $0x30] sm:$0xf]
        %v2736 = vld [vmem:[%s5 + $0x34] sm:$0xf]
        %v2737 = vld [vmem:[%s5 + $0x38] sm:$0xf]
        %v2738 = vld [vmem:[%s5 + $0x3c] sm:$0xf]
        %v2739 = vld [vmem:[%s5 + $0x40] sm:$0xf]
        %v2740 = vld [vmem:[%s5 + $0x44] sm:$0xf]
        %v2741 = vld [vmem:[%s5 + $0x48] sm:$0xf]
        %v2742 = vld [vmem:[%s5 + $0x4c] sm:$0xf]
        %v2743 = vld [vmem:[%s5 + $0x50] sm:$0xf]
        %v2744 = vld [vmem:[%s5 + $0x54] sm:$0xf]
        %v2745 = vld [vmem:[%s5 + $0x58] sm:$0xf]
        %v2746 = vld [vmem:[%s5 + $0x5c] sm:$0xf]
        %v2747 = vld [vmem:[%s5 + $0x60] sm:$0xf]
        %v2748 = vld [vmem:[%s5 + $0x64] sm:$0xf]
        %v2749 = vld [vmem:[%s5 + $0x68] sm:$0xf]
        %v2750 = vld [vmem:[%s5 + $0x6c] sm:$0xf]
        %v2751 = vld [vmem:[%s5 + $0x70] sm:$0xf]
        %v2752 = vld [vmem:[%s5 + $0x74] sm:$0xf]
        %v2753 = vld [vmem:[%s5 + $0x78] sm:$0xf]
        %v2754 = vld [vmem:[%s5 + $0x7c] sm:$0xf]
        %v2755 = vld [vmem:[%s5 + $0x80] sm:$0xf]
        %v2756 = vld [vmem:[%s5 + $0x84] sm:$0xf]
        %v2757 = vld [vmem:[%s5 + $0x88] sm:$0xf]
        %v2758 = vld [vmem:[%s5 + $0x8c] sm:$0xf]
        %v2759 = vld [vmem:[%s5 + $0x90] sm:$0xf]
        %v2760 = vld [vmem:[%s5 + $0x94] sm:$0xf]
        %v2761 = vld [vmem:[%s5 + $0x98] sm:$0xf]
        %v2762 = vld [vmem:[%s5 + $0x9c] sm:$0xf]
        %v2763 = vld [vmem:[%s5 + $0xa0] sm:$0xf]
        %v2764 = vld [vmem:[%s5 + $0xa4] sm:$0xf]
        %v2765 = vld [vmem:[%s5 + $0xa8] sm:$0xf]
        %v2766 = vld [vmem:[%s5 + $0xac] sm:$0xf]
        %v2767 = vld [vmem:[%s5 + $0xb0] sm:$0xf]
        %v2768 = vld [vmem:[%s5 + $0xb4] sm:$0xf]
        %v2769 = vld [vmem:[%s5 + $0xb8] sm:$0xf]
        %v2770 = vld [vmem:[%s5 + $0xbc] sm:$0xf]
        %v2771 = vld [vmem:[%s5 + $0xc0] sm:$0xf]
        %v2772 = vld [vmem:[%s5 + $0xc4] sm:$0xf]
        %v2773 = vld [vmem:[%s5 + $0xc8] sm:$0xf]
        %v2774 = vld [vmem:[%s5 + $0xcc] sm:$0xf]
        %v2775 = vld [vmem:[%s5 + $0xd0] sm:$0xf]
        %v2776 = vld [vmem:[%s5 + $0xd4] sm:$0xf]
        %v2777 = vld [vmem:[%s5 + $0xd8] sm:$0xf]
        %v2778 = vld [vmem:[%s5 + $0xdc] sm:$0xf]
        %v2779 = vld [vmem:[%s5 + $0xe0] sm:$0xf]
        %v2780 = vld [vmem:[%s5 + $0xe4] sm:$0xf]
        %v2781 = vld [vmem:[%s5 + $0xe8] sm:$0xf]
        %v2782 = vld [vmem:[%s5 + $0xec] sm:$0xf]
        %v2783 = vld [vmem:[%s5 + $0xf0] sm:$0xf]
        %v2784 = vld [vmem:[%s5 + $0xf4] sm:$0xf]
        %v2785 = vld [vmem:[%s5 + $0xf8] sm:$0xf]
        %v2786 = vld [vmem:[%s5 + $0xfc] sm:$0xf]
        %v2787 = vld [vmem:[%s5 + $0x100] sm:$0xf]
        %v2788 = vld [vmem:[%s5 + $0x104] sm:$0xf]
        %v2789 = vld [vmem:[%s5 + $0x108] sm:$0xf]
        %v2790 = vld [vmem:[%s5 + $0x10c] sm:$0xf]
        %v2791 = vld [vmem:[%s5 + $0x110] sm:$0xf]
        %v2792 = vld [vmem:[%s5 + $0x114] sm:$0xf]
        %v2793 = vld [vmem:[%s5 + $0x118] sm:$0xf]
        %v2794 = vld [vmem:[%s5 + $0x11c] sm:$0xf]
        %v2795 = vld [vmem:[%s5 + $0x120] sm:$0xf]
        %v2796 = vld [vmem:[%s5 + $0x124] sm:$0xf]
        %v2797 = vld [vmem:[%s5 + $0x128] sm:$0xf]
        %v2798 = vld [vmem:[%s5 + $0x12c] sm:$0xf]
        %v2799 = vld [vmem:[%s5 + $0x130] sm:$0xf]
        %v2800 = vld [vmem:[%s5 + $0x134] sm:$0xf]
        %v2801 = vld [vmem:[%s5 + $0x138] sm:$0xf]
        %v2802 = vld [vmem:[%s5 + $0x13c] sm:$0xf]
        %v2803 = vld [vmem:[%s5 + $0x140] sm:$0xf]
        %v2804 = vld [vmem:[%s5 + $0x144] sm:$0xf]
        %v2805 = vld [vmem:[%s5 + $0x148] sm:$0xf]
        %v2806 = vld [vmem:[%s5 + $0x14c] sm:$0xf]
        %v2807 = vld [vmem:[%s5 + $0x150] sm:$0xf]
        %v2808 = vld [vmem:[%s5 + $0x154] sm:$0xf]
        %v2809 = vld [vmem:[%s5 + $0x158] sm:$0xf]
        %v2810 = vld [vmem:[%s5 + $0x15c] sm:$0xf]
        %v2811 = vld [vmem:[%s5 + $0x160] sm:$0xf]
        %v2812 = vld [vmem:[%s5 + $0x164] sm:$0xf]
        %v2813 = vld [vmem:[%s5 + $0x168] sm:$0xf]
        %v2814 = vld [vmem:[%s5 + $0x16c] sm:$0xf]
        %v2815 = vld [vmem:[%s5 + $0x170] sm:$0xf]
        %v2816 = vld [vmem:[%s5 + $0x174] sm:$0xf]
        %v2817 = vld [vmem:[%s5 + $0x178] sm:$0xf]
        %v2818 = vld [vmem:[%s5 + $0x17c] sm:$0xf]
        %v2819 = vld [vmem:[%s5 + $0x180] sm:$0xf]
        %v2820 = vld [vmem:[%s5 + $0x184] sm:$0xf]
        %v2821 = vld [vmem:[%s5 + $0x188] sm:$0xf]
        %v2822 = vld [vmem:[%s5 + $0x18c] sm:$0xf]
        %v2823 = vld [vmem:[%s5 + $0x190] sm:$0xf]
        %v2824 = vld [vmem:[%s5 + $0x194] sm:$0xf]
        %v2825 = vld [vmem:[%s5 + $0x198] sm:$0xf]
        %v2826 = vld [vmem:[%s5 + $0x19c] sm:$0xf]
        %v2827 = vld [vmem:[%s5 + $0x1a0] sm:$0xf]
        %v2828 = vld [vmem:[%s5 + $0x1a4] sm:$0xf]
        %v2829 = vld [vmem:[%s5 + $0x1a8] sm:$0xf]
        %v2830 = vld [vmem:[%s5 + $0x1ac] sm:$0xf]
        %v2831 = vld [vmem:[%s5 + $0x1b0] sm:$0xf]
        %v2832 = vld [vmem:[%s5 + $0x1b4] sm:$0xf]
        %v2833 = vld [vmem:[%s5 + $0x1b8] sm:$0xf]
        %v2834 = vld [vmem:[%s5 + $0x1bc] sm:$0xf]
        %v2835 = vld [vmem:[%s5 + $0x1c0] sm:$0xf]
        %v2836 = vld [vmem:[%s5 + $0x1c4] sm:$0xf]
        %v2837 = vld [vmem:[%s5 + $0x1c8] sm:$0xf]
        %v2838 = vld [vmem:[%s5 + $0x1cc] sm:$0xf]
        %v2839 = vld [vmem:[%s5 + $0x1d0] sm:$0xf]
        %v2840 = vld [vmem:[%s5 + $0x1d4] sm:$0xf]
        %v2841 = vld [vmem:[%s5 + $0x1d8] sm:$0xf]
        %v2842 = vld [vmem:[%s5 + $0x1dc] sm:$0xf]
        %v2843 = vld [vmem:[%s5 + $0x1e0] sm:$0xf]
        %v2844 = vld [vmem:[%s5 + $0x1e4] sm:$0xf]
        %v2845 = vld [vmem:[%s5 + $0x1e8] sm:$0xf]
        %v2846 = vld [vmem:[%s5 + $0x1ec] sm:$0xf]
        %v2847 = vld [vmem:[%s5 + $0x1f0] sm:$0xf]
        %v2848 = vld [vmem:[%s5 + $0x1f4] sm:$0xf]
        %v2849 = vld [vmem:[%s5 + $0x1f8] sm:$0xf]
        %v2850 = vld [vmem:[%s5 + $0x1fc] sm:$0xf]
        %v2851 = vld [vmem:[%s6] sm:$0x1]
        %v2980 = vunpack.c.l.b16 %v2723
        %v2981 = vunpack.c.l.b16 %v2724
        %v2982 = vunpack.c.l.b16 %v2725
        %v2983 = vunpack.c.l.b16 %v2726
        %v2984 = vunpack.c.l.b16 %v2727
        %v2985 = vunpack.c.l.b16 %v2728
        %v2986 = vunpack.c.l.b16 %v2729
        %v2987 = vunpack.c.l.b16 %v2730
        %v2988 = vunpack.c.l.b16 %v2731
        %v2989 = vunpack.c.l.b16 %v2732
        %v2990 = vunpack.c.l.b16 %v2733
        %v2991 = vunpack.c.l.b16 %v2734
        %v2992 = vunpack.c.l.b16 %v2735
        %v2993 = vunpack.c.l.b16 %v2736
        %v2994 = vunpack.c.l.b16 %v2737
        %v2995 = vunpack.c.l.b16 %v2738
        %v2996 = vunpack.c.l.b16 %v2739
        %v2997 = vunpack.c.l.b16 %v2740
        %v2998 = vunpack.c.l.b16 %v2741
        %v2999 = vunpack.c.l.b16 %v2742
        %v3000 = vunpack.c.l.b16 %v2743
        %v3001 = vunpack.c.l.b16 %v2744
        %v3002 = vunpack.c.l.b16 %v2745
        %v3003 = vunpack.c.l.b16 %v2746
        %v3004 = vunpack.c.l.b16 %v2747
        %v3005 = vunpack.c.l.b16 %v2748
        %v3006 = vunpack.c.l.b16 %v2749
        %v3007 = vunpack.c.l.b16 %v2750
        %v3008 = vunpack.c.l.b16 %v2751
        %v3009 = vunpack.c.l.b16 %v2752
        %v3010 = vunpack.c.l.b16 %v2753
        %v3011 = vunpack.c.l.b16 %v2754
        %v3012 = vunpack.c.l.b16 %v2755
        %v3013 = vunpack.c.l.b16 %v2756
        %v3014 = vunpack.c.l.b16 %v2757
        %v3015 = vunpack.c.l.b16 %v2758
        %v3016 = vunpack.c.l.b16 %v2759
        %v3017 = vunpack.c.l.b16 %v2760
        %v3018 = vunpack.c.l.b16 %v2761
        %v3019 = vunpack.c.l.b16 %v2762
        %v3020 = vunpack.c.l.b16 %v2763
        %v3021 = vunpack.c.l.b16 %v2764
        %v3022 = vunpack.c.l.b16 %v2765
        %v3023 = vunpack.c.l.b16 %v2766
        %v3024 = vunpack.c.l.b16 %v2767
        %v3025 = vunpack.c.l.b16 %v2768
        %v3026 = vunpack.c.l.b16 %v2769
        %v3027 = vunpack.c.l.b16 %v2770
        %v3028 = vunpack.c.l.b16 %v2771
        %v3029 = vunpack.c.l.b16 %v2772
        %v3030 = vunpack.c.l.b16 %v2773
        %v3031 = vunpack.c.l.b16 %v2774
        %v3032 = vunpack.c.l.b16 %v2775
        %v3033 = vunpack.c.l.b16 %v2776
        %v3034 = vunpack.c.l.b16 %v2777
        %v3035 = vunpack.c.l.b16 %v2778
        %v3036 = vunpack.c.l.b16 %v2779
        %v3037 = vunpack.c.l.b16 %v2780
        %v3038 = vunpack.c.l.b16 %v2781
        %v3039 = vunpack.c.l.b16 %v2782
        %v3040 = vunpack.c.l.b16 %v2783
        %v3041 = vunpack.c.l.b16 %v2784
        %v3042 = vunpack.c.l.b16 %v2785
        %v3043 = vunpack.c.l.b16 %v2786
        %v3044 = vunpack.c.l.b16 %v2787
        %v3045 = vunpack.c.l.b16 %v2788
        %v3046 = vunpack.c.l.b16 %v2789
        %v3047 = vunpack.c.l.b16 %v2790
        %v3048 = vunpack.c.l.b16 %v2791
        %v3049 = vunpack.c.l.b16 %v2792
        %v3050 = vunpack.c.l.b16 %v2793
        %v3051 = vunpack.c.l.b16 %v2794
        %v3052 = vunpack.c.l.b16 %v2795
        %v3053 = vunpack.c.l.b16 %v2796
        %v3054 = vunpack.c.l.b16 %v2797
        %v3055 = vunpack.c.l.b16 %v2798
        %v3056 = vunpack.c.l.b16 %v2799
        %v3057 = vunpack.c.l.b16 %v2800
        %v3058 = vunpack.c.l.b16 %v2801
        %v3059 = vunpack.c.l.b16 %v2802
        %v3060 = vunpack.c.l.b16 %v2803
        %v3061 = vunpack.c.l.b16 %v2804
        %v3062 = vunpack.c.l.b16 %v2805
        %v3063 = vunpack.c.l.b16 %v2806
        %v3064 = vunpack.c.l.b16 %v2807
        %v3065 = vunpack.c.l.b16 %v2808
        %v3066 = vunpack.c.l.b16 %v2809
        %v3067 = vunpack.c.l.b16 %v2810
        %v3068 = vunpack.c.l.b16 %v2811
        %v3069 = vunpack.c.l.b16 %v2812
        %v3070 = vunpack.c.l.b16 %v2813
        %v3071 = vunpack.c.l.b16 %v2814
        %v3072 = vunpack.c.l.b16 %v2815
        %v3073 = vunpack.c.l.b16 %v2816
        %v3074 = vunpack.c.l.b16 %v2817
        %v3075 = vunpack.c.l.b16 %v2818
        %v3076 = vunpack.c.l.b16 %v2819
        %v3077 = vunpack.c.l.b16 %v2820
        %v3078 = vunpack.c.l.b16 %v2821
        %v3079 = vunpack.c.l.b16 %v2822
        %v3080 = vunpack.c.l.b16 %v2823
        %v3081 = vunpack.c.l.b16 %v2824
        %v3082 = vunpack.c.l.b16 %v2825
        %v3083 = vunpack.c.l.b16 %v2826
        %v3084 = vunpack.c.l.b16 %v2827
        %v3085 = vunpack.c.l.b16 %v2828
        %v3086 = vunpack.c.l.b16 %v2829
        %v3087 = vunpack.c.l.b16 %v2830
        %v3088 = vunpack.c.l.b16 %v2831
        %v3089 = vunpack.c.l.b16 %v2832
        %v3090 = vunpack.c.l.b16 %v2833
        %v3091 = vunpack.c.l.b16 %v2834
        %v3092 = vunpack.c.l.b16 %v2835
        %v3093 = vunpack.c.l.b16 %v2836
        %v3094 = vunpack.c.l.b16 %v2837
        %v3095 = vunpack.c.l.b16 %v2838
        %v3096 = vunpack.c.l.b16 %v2839
        %v3097 = vunpack.c.l.b16 %v2840
        %v3098 = vunpack.c.l.b16 %v2841
        %v3099 = vunpack.c.l.b16 %v2842
        %v3100 = vunpack.c.l.b16 %v2843
        %v3101 = vunpack.c.l.b16 %v2844
        %v3102 = vunpack.c.l.b16 %v2845
        %v3103 = vunpack.c.l.b16 %v2846
        %v3104 = vunpack.c.l.b16 %v2847
        %v3105 = vunpack.c.l.b16 %v2848
        %v3106 = vunpack.c.l.b16 %v2849
        %v3107 = vunpack.c.l.b16 %v2850
        %v3108 = vpack.c.b16 %v2981, %v2980
        %v3109 = vpack.c.b16 %v2983, %v2982
        %v3110 = vpack.c.b16 %v2985, %v2984
        %v3111 = vpack.c.b16 %v2987, %v2986
        %v3112 = vpack.c.b16 %v2989, %v2988
        %v3113 = vpack.c.b16 %v2991, %v2990
        %v3114 = vpack.c.b16 %v2993, %v2992
        %v3115 = vpack.c.b16 %v2995, %v2994
        %v3116 = vpack.c.b16 %v2997, %v2996
        %v3117 = vpack.c.b16 %v2999, %v2998
        %v3118 = vpack.c.b16 %v3001, %v3000
        %v3119 = vpack.c.b16 %v3003, %v3002
        %v3120 = vpack.c.b16 %v3005, %v3004
        %v3121 = vpack.c.b16 %v3007, %v3006
        %v3122 = vpack.c.b16 %v3009, %v3008
        %v3123 = vpack.c.b16 %v3011, %v3010
        %v3124 = vpack.c.b16 %v3013, %v3012
        %v3125 = vpack.c.b16 %v3015, %v3014
        %v3126 = vpack.c.b16 %v3017, %v3016
        %v3127 = vpack.c.b16 %v3019, %v3018
        %v3128 = vpack.c.b16 %v3021, %v3020
        %v3129 = vpack.c.b16 %v3023, %v3022
        %v3130 = vpack.c.b16 %v3025, %v3024
        %v3131 = vpack.c.b16 %v3027, %v3026
        %v3132 = vpack.c.b16 %v3029, %v3028
        %v3133 = vpack.c.b16 %v3031, %v3030
        %v3134 = vpack.c.b16 %v3033, %v3032
        %v3135 = vpack.c.b16 %v3035, %v3034
        %v3136 = vpack.c.b16 %v3037, %v3036
        %v3137 = vpack.c.b16 %v3039, %v3038
        %v3138 = vpack.c.b16 %v3041, %v3040
        %v3139 = vpack.c.b16 %v3043, %v3042
        %v3140 = vpack.c.b16 %v3045, %v3044
        %v3141 = vpack.c.b16 %v3047, %v3046
        %v3142 = vpack.c.b16 %v3049, %v3048
        %v3143 = vpack.c.b16 %v3051, %v3050
        %v3144 = vpack.c.b16 %v3053, %v3052
        %v3145 = vpack.c.b16 %v3055, %v3054
        %v3146 = vpack.c.b16 %v3057, %v3056
        %v3147 = vpack.c.b16 %v3059, %v3058
        %v3148 = vpack.c.b16 %v3061, %v3060
        %v3149 = vpack.c.b16 %v3063, %v3062
        %v3150 = vpack.c.b16 %v3065, %v3064
        %v3151 = vpack.c.b16 %v3067, %v3066
        %v3152 = vpack.c.b16 %v3069, %v3068
        %v3153 = vpack.c.b16 %v3071, %v3070
        %v3154 = vpack.c.b16 %v3073, %v3072
        %v3155 = vpack.c.b16 %v3075, %v3074
        %v3156 = vpack.c.b16 %v3077, %v3076
        %v3157 = vpack.c.b16 %v3079, %v3078
        %v3158 = vpack.c.b16 %v3081, %v3080
        %v3159 = vpack.c.b16 %v3083, %v3082
        %v3160 = vpack.c.b16 %v3085, %v3084
        %v3161 = vpack.c.b16 %v3087, %v3086
        %v3162 = vpack.c.b16 %v3089, %v3088
        %v3163 = vpack.c.b16 %v3091, %v3090
        %v3164 = vpack.c.b16 %v3093, %v3092
        %v3165 = vpack.c.b16 %v3095, %v3094
        %v3166 = vpack.c.b16 %v3097, %v3096
        %v3167 = vpack.c.b16 %v3099, %v3098
        %v3168 = vpack.c.b16 %v3101, %v3100
        %v3169 = vpack.c.b16 %v3103, %v3102
        %v3170 = vpack.c.b16 %v3105, %v3104
        %v3171 = vpack.c.b16 %v3107, %v3106
        %3236 = vmatprep.subr.bf16.mxu0 0
        %3237 = vmatpush1.bf16.msra.mxu0 %v3108
        %3238 = vmatprep.subr.bf16.mxu0 0
        %3239 = vmatpush1.bf16.msra.mxu0 %v3109
        %3240 = vmatprep.subr.bf16.mxu0 0
        %3241 = vmatpush1.bf16.msra.mxu0 %v3110
        %3242 = vmatprep.subr.bf16.mxu0 0
        %3243 = vmatpush1.bf16.msra.mxu0 %v3111
        %3244 = vmatprep.subr.bf16.mxu0 0
        %3245 = vmatpush1.bf16.msra.mxu0 %v3112
        %3246 = vmatprep.subr.bf16.mxu0 0
        %3247 = vmatpush1.bf16.msra.mxu0 %v3113
        %3248 = vmatprep.subr.bf16.mxu0 0
        %3249 = vmatpush1.bf16.msra.mxu0 %v3114
        %3250 = vmatprep.subr.bf16.mxu0 0
        %3251 = vmatpush1.bf16.msra.mxu0 %v3115
        %3252 = vmatprep.subr.bf16.mxu0 0
        %3253 = vmatpush1.bf16.msra.mxu0 %v3116
        %3254 = vmatprep.subr.bf16.mxu0 0
        %3255 = vmatpush1.bf16.msra.mxu0 %v3117
        %3256 = vmatprep.subr.bf16.mxu0 0
        %3257 = vmatpush1.bf16.msra.mxu0 %v3118
        %3258 = vmatprep.subr.bf16.mxu0 0
        %3259 = vmatpush1.bf16.msra.mxu0 %v3119
        %3260 = vmatprep.subr.bf16.mxu0 0
        %3261 = vmatpush1.bf16.msra.mxu0 %v3120
        %3262 = vmatprep.subr.bf16.mxu0 0
        %3263 = vmatpush1.bf16.msra.mxu0 %v3121
        %3264 = vmatprep.subr.bf16.mxu0 0
        %3265 = vmatpush1.bf16.msra.mxu0 %v3122
        %3266 = vmatprep.subr.bf16.mxu0 0
        %3267 = vmatpush1.bf16.msra.mxu0 %v3123
        %3268 = vmatprep.mubr.bf16.mxu0 %v2716
        %3269 = vmatmul.mubr.bf16.gmra.mrb[0].mxu0 %v2715
        %v3270 = vpop.f32.mrb[0].mxu0
        %v3271 = vadd.f32 %v2851, %v3270
        %v3272 = vpop.f32.mrb[0].mxu0
        %v3273 = vpop.f32.mrb[0].mxu0
        %v3274 = vpop.f32.mrb[0].mxu0
        %3275 = vdwg.mxu0
        %3276 = vmatprep.subr.bf16.mxu0 0
        %3277 = vmatpush1.bf16.msra.mxu0 %v3124
        %3278 = vmatprep.subr.bf16.mxu0 0
        %3279 = vmatpush1.bf16.msra.mxu0 %v3125
        %3280 = vmatprep.subr.bf16.mxu0 0
        %3281 = vmatpush1.bf16.msra.mxu0 %v3126
        %3282 = vmatprep.subr.bf16.mxu0 0
        %3283 = vmatpush1.bf16.msra.mxu0 %v3127
        %3284 = vmatprep.subr.bf16.mxu0 0
        %3285 = vmatpush1.bf16.msra.mxu0 %v3128
        %3286 = vmatprep.subr.bf16.mxu0 0
        %3287 = vmatpush1.bf16.msra.mxu0 %v3129
        %3288 = vmatprep.subr.bf16.mxu0 0
        %3289 = vmatpush1.bf16.msra.mxu0 %v3130
        %3290 = vmatprep.subr.bf16.mxu0 0
        %3291 = vmatpush1.bf16.msra.mxu0 %v3131
        %3292 = vmatprep.subr.bf16.mxu0 0
        %3293 = vmatpush1.bf16.msra.mxu0 %v3132
        %3294 = vmatprep.subr.bf16.mxu0 0
        %3295 = vmatpush1.bf16.msra.mxu0 %v3133
        %3296 = vmatprep.subr.bf16.mxu0 0
        %3297 = vmatpush1.bf16.msra.mxu0 %v3134
        %3298 = vmatprep.subr.bf16.mxu0 0
        %3299 = vmatpush1.bf16.msra.mxu0 %v3135
        %3300 = vmatprep.subr.bf16.mxu0 0
        %3301 = vmatpush1.bf16.msra.mxu0 %v3136
        %3302 = vmatprep.subr.bf16.mxu0 0
        %3303 = vmatpush1.bf16.msra.mxu0 %v3137
        %3304 = vmatprep.subr.bf16.mxu0 0
        %3305 = vmatpush1.bf16.msra.mxu0 %v3138
        %3306 = vmatprep.subr.bf16.mxu0 0
        %3307 = vmatpush1.bf16.msra.mxu0 %v3139
        %3308 = vmatprep.mubr.bf16.mxu0 %v2718
        %3309 = vmatmul.mubr.bf16.gmra.mrb[0].mxu0 %v2717
        %v3310 = vpop.f32.mrb[0].mxu0
        %v3311 = vadd.f32 %v3271, %v3310
        %v3312 = vpop.f32.mrb[0].mxu0
        %v3313 = vpop.f32.mrb[0].mxu0
        %v3314 = vpop.f32.mrb[0].mxu0
        %3315 = vdwg.mxu0
        %3316 = vmatprep.subr.bf16.mxu0 0
        %3317 = vmatpush1.bf16.msra.mxu0 %v3140
        %3318 = vmatprep.subr.bf16.mxu0 0
        %3319 = vmatpush1.bf16.msra.mxu0 %v3141
        %3320 = vmatprep.subr.bf16.mxu0 0
        %3321 = vmatpush1.bf16.msra.mxu0 %v3142
        %3322 = vmatprep.subr.bf16.mxu0 0
        %3323 = vmatpush1.bf16.msra.mxu0 %v3143
        %3324 = vmatprep.subr.bf16.mxu0 0
        %3325 = vmatpush1.bf16.msra.mxu0 %v3144
        %3326 = vmatprep.subr.bf16.mxu0 0
        %3327 = vmatpush1.bf16.msra.mxu0 %v3145
        %3328 = vmatprep.subr.bf16.mxu0 0
        %3329 = vmatpush1.bf16.msra.mxu0 %v3146
        %3330 = vmatprep.subr.bf16.mxu0 0
        %3331 = vmatpush1.bf16.msra.mxu0 %v3147
        %3332 = vmatprep.subr.bf16.mxu0 0
        %3333 = vmatpush1.bf16.msra.mxu0 %v3148
        %3334 = vmatprep.subr.bf16.mxu0 0
        %3335 = vmatpush1.bf16.msra.mxu0 %v3149
        %3336 = vmatprep.subr.bf16.mxu0 0
        %3337 = vmatpush1.bf16.msra.mxu0 %v3150
        %3338 = vmatprep.subr.bf16.mxu0 0
        %3339 = vmatpush1.bf16.msra.mxu0 %v3151
        %3340 = vmatprep.subr.bf16.mxu0 0
        %3341 = vmatpush1.bf16.msra.mxu0 %v3152
        %3342 = vmatprep.subr.bf16.mxu0 0
        %3343 = vmatpush1.bf16.msra.mxu0 %v3153
        %3344 = vmatprep.subr.bf16.mxu0 0
        %3345 = vmatpush1.bf16.msra.mxu0 %v3154
        %3346 = vmatprep.subr.bf16.mxu0 0
        %3347 = vmatpush1.bf16.msra.mxu0 %v3155
        %3348 = vmatprep.mubr.bf16.mxu0 %v2720
        %3349 = vmatmul.mubr.bf16.gmra.mrb[0].mxu0 %v2719
        %v3350 = vpop.f32.mrb[0].mxu0
        %v3351 = vadd.f32 %v3311, %v3350
        %v3352 = vpop.f32.mrb[0].mxu0
        %v3353 = vpop.f32.mrb[0].mxu0
        %v3354 = vpop.f32.mrb[0].mxu0
        %3355 = vdwg.mxu0
        %3356 = vmatprep.subr.bf16.mxu0 0
        %3357 = vmatpush1.bf16.msra.mxu0 %v3156
        %3358 = vmatprep.subr.bf16.mxu0 0
        %3359 = vmatpush1.bf16.msra.mxu0 %v3157
        %3360 = vmatprep.subr.bf16.mxu0 0
        %3361 = vmatpush1.bf16.msra.mxu0 %v3158
        %3362 = vmatprep.subr.bf16.mxu0 0
        %3363 = vmatpush1.bf16.msra.mxu0 %v3159
        %3364 = vmatprep.subr.bf16.mxu0 0
        %3365 = vmatpush1.bf16.msra.mxu0 %v3160
        %3366 = vmatprep.subr.bf16.mxu0 0
        %3367 = vmatpush1.bf16.msra.mxu0 %v3161
        %3368 = vmatprep.subr.bf16.mxu0 0
        %3369 = vmatpush1.bf16.msra.mxu0 %v3162
        %3370 = vmatprep.subr.bf16.mxu0 0
        %3371 = vmatpush1.bf16.msra.mxu0 %v3163
        %3372 = vmatprep.subr.bf16.mxu0 0
        %3373 = vmatpush1.bf16.msra.mxu0 %v3164
        %3374 = vmatprep.subr.bf16.mxu0 0
        %3375 = vmatpush1.bf16.msra.mxu0 %v3165
        %3376 = vmatprep.subr.bf16.mxu0 0
        %3377 = vmatpush1.bf16.msra.mxu0 %v3166
        %3378 = vmatprep.subr.bf16.mxu0 0
        %3379 = vmatpush1.bf16.msra.mxu0 %v3167
        %3380 = vmatprep.subr.bf16.mxu0 0
        %3381 = vmatpush1.bf16.msra.mxu0 %v3168
        %3382 = vmatprep.subr.bf16.mxu0 0
        %3383 = vmatpush1.bf16.msra.mxu0 %v3169
        %3384 = vmatprep.subr.bf16.mxu0 0
        %3385 = vmatpush1.bf16.msra.mxu0 %v3170
        %3386 = vmatprep.subr.bf16.mxu0 0
        %3387 = vmatpush1.bf16.msra.mxu0 %v3171
        %3388 = vmatprep.mubr.bf16.mxu0 %v2722
        %3389 = vmatmul.mubr.bf16.gmra.mrb[0].mxu0 %v2721
        %v3390 = vpop.f32.mrb[0].mxu0
        %v3391 = vadd.f32 %v3351, %v3390
        %v3392 = vpop.f32.mrb[0].mxu0
        %v3393 = vpop.f32.mrb[0].mxu0
        %v3394 = vpop.f32.mrb[0].mxu0
        %3395 = vdwg.mxu0
        %v3396 = vlaneseq
        %v3397 = vshrl.u32 %v3396, 7
        %v3398 = vsub.s32 0, %v3397
        %v3399 = vrot.slane %v3391, %v3398
        %3400 = vst [vmem:[%s304] sm:$0xff] %v3399
      $region60: #{base_net_forward.1} parent=47 // pred_fallthru
        _
      %p3401 = scmp.lt.s32.totalorder %s22, 1
      %s3402 = scalar_select %p3401, %s22, 1
      %s3403 = smul.addr %s3402, 8
      %s3404 = scalar_lea.vmem %s7, %s3403
      // Predicated region
      $region61: #{base_net_forward.1} parent=47 // pred_check
        %p3405 = pneg %p202
      $region62: #{base_net_forward.1} parent=47 // pred_check_branch
        %3407 = sbr.rel (%p3405) target = $region64
      $region63: #{base_net_forward.1} parent=47 // pred_region
        _
      $region64: #{base_net_forward.1} parent=47 // pred_fallthru
        _
    $region48: #{base_net_forward.1} parent=5 // pred_fallthru
      _
    %p3408 = scmp.le.s32.totalorder 2, %s13
    // Predicated region
    $region65: #{base_net_forward.1} parent=5 // pred_check
      %p3409 = pneg %p3408
    $region66: #{base_net_forward.1} parent=5 // pred_check_branch
      %3411 = sbr.rel (%p3409) target = $region68
    $region67: #{base_net_forward.1} parent=5 // pred_region
      %s3412 = ssub.s32 %s13, 2
      // Predicated region
      $region69: #{base_net_forward.1} parent=67 // pred_check
        %p3413 = pneg %p208
      $region70: #{base_net_forward.1} parent=67 // pred_check_branch
        %3415 = sbr.rel (%p3413) target = $region72
      $region71: #{base_net_forward.1} parent=67 // pred_region
        %p3416 = scmp.lt.s32.totalorder %s24, 1
        %s3417 = scalar_select %p3416, %s24, 1
        %s3418 = smul.addr %s3417, 8
        %s3419 = scalar_lea.vmem %s7, %s3418
      $region72: #{base_net_forward.1} parent=67 // pred_fallthru
        _
    $region68: #{base_net_forward.1} parent=5 // pred_fallthru
      _
  $region6: #{base_net_forward.1} parent=0 // loop_footer
    %s17 = sadd.s32 1, %s13
  $region7: #{base_net_forward.1} parent=0 // loop_footer_branch
    %12 = sbr.rel target = $region3
  $region8: #{base_net_forward.1} parent=0 // loop_exit
    _

</llo_original>
